<compile_context>
chip_gen: v7x
topology: tpu7x:2x2x1
jax: 0.10.0
libtpu: 0.0.40
codegen_flags: <defaults>
</compile_context>

<pallas_src>
import functools

import jax
import jax.numpy as jnp
from jax import lax
from jax.experimental import pallas as pl
from jax.experimental.pallas import tpu as pltpu


def _round_up(x, m):
    return ((x + m - 1) // m) * m


def _review_classifier_kernel(
    x_ref,      # (seq_chunk, Bt, Ep)   gathered embedding rows (matmul dtype)
    wx_ref,     # (Ep, 4Hp)  LSTM input->gates   (matmul dtype)
    wh_ref,     # (Hp, 4Hp)  LSTM hidden->gates  (matmul dtype)
    b_ref,      # (1, 4Hp)   LSTM gate bias      (f32)
    w1_ref,     # (Hp, F1p)  linear1             (matmul dtype)
    b1_ref,     # (1, F1p)   (f32)
    w2_ref,     # (1, F1p)   linear2 weight row  (f32)
    b2_ref,     # (1, 1)     (f32)
    out_ref,    # (Bt, 1)    sigmoid probability (f32)
    gx_scr,     # VMEM (seq_chunk*Bt, 4Hp) f32   staged input projection
    c_scr,      # VMEM (Bt, Hp) f32  cell state   (persists across grid steps)
    h_scr,      # VMEM (Bt, Hp) f32  hidden state (persists across grid steps)
    *,
    seq_chunk: int,
    bt: int,
    hidden_p: int,
    mm_dtype,
    unroll: int,
):
    Hp = hidden_p
    si = pl.program_id(1)          # sequence-chunk axis ('arbitrary', serial)

    @pl.when(si == 0)
    def _init():
        c_scr[...] = jnp.zeros_like(c_scr)
        h_scr[...] = jnp.zeros_like(h_scr)

    # Hoisted input projection for the whole chunk: ONE (chunk*Bt, Ep)@(Ep,4Hp)
    # MXU matmul (bf16 operands, f32 accumulate) + one bias broadcast, staged
    # into VMEM scratch so only c/h stay live through the recurrence.
    x = x_ref[...].reshape(seq_chunk * bt, -1)
    gx_scr[...] = (
        jnp.dot(x, wx_ref[...], preferred_element_type=jnp.float32) + b_ref[...]
    )

    wh = wh_ref[...]

    def step(t, carry):
        c, h = carry
        row = pl.multiple_of(t * bt, 8)          # sublane-aligned dynamic slice
        gates = gx_scr[pl.ds(row, bt), :] + jnp.dot(
            h.astype(mm_dtype), wh, preferred_element_type=jnp.float32)
        # Hp is a multiple of 128 -> every gate slice is a full-lane-width view.
        i_g = jax.nn.sigmoid(gates[:, 0 * Hp:1 * Hp])
        f_g = jax.nn.sigmoid(gates[:, 1 * Hp:2 * Hp])
        g_g = jnp.tanh(gates[:, 2 * Hp:3 * Hp])
        o_g = jax.nn.sigmoid(gates[:, 3 * Hp:4 * Hp])
        c = f_g * c + i_g * g_g
        h = o_g * jnp.tanh(c)
        return c, h

    c, h = lax.fori_loop(0, seq_chunk, step, (c_scr[...], h_scr[...]),
                         unroll=unroll)

    # Full-width (Bt, k*128) stores -> unmasked vst.
    c_scr[...] = c
    h_scr[...] = h

    @pl.when(si == pl.num_programs(1) - 1)
    def _head():
        # Classifier head on the final CELL state c (matches the reference).
        z = (jnp.dot(c.astype(mm_dtype), w1_ref[...],
                     preferred_element_type=jnp.float32) + b1_ref[...])
        z = jnp.maximum(z, 0.0)                                  # ReLU
        # (Bt,1024)@(1024,1) replaced by VPU mul + XLU lane reduction
        # (keeps the MXU free; confirmed by the perf review).
        logit = jnp.sum(z * w2_ref[...], axis=-1, keepdims=True) + b2_ref[...]
        out_ref[...] = jax.nn.sigmoid(logit)


def review_classifier_forward(word_ids, params, *, seq_chunk=None,
                              batch_tiles=1, matmul_dtype=jnp.bfloat16):
    """word_ids: (B, S) int32 token ids (replaces the one-hot (B,S,V) input)."""
    emb, wx, wh, b, w1, b1, w2, b2 = params
    B, S = word_ids.shape
    V, E = emb.shape
    H = wh.shape[0]
    F1 = w1.shape[1]
    f32 = jnp.float32

    # ---- pad to vreg-aligned shapes (lane=128, sublane=8) ------------------
    LANE, SUB = 128, 8
    Ep = _round_up(E, LANE)
    Hp = _round_up(H, LANE)
    F1p = _round_up(F1, LANE)
    Bp = _round_up(B, SUB * batch_tiles)
    Bt = Bp // batch_tiles

    # Zero-padding keeps padded lanes of c/h exactly zero: padded gate lanes
    # see gates==0 -> i=f=o=0.5, g=0 -> c_pad=0.5*c_pad (init 0), h_pad=0.
    emb_p = jnp.zeros((V, Ep), matmul_dtype).at[:, :E].set(
        emb.astype(matmul_dtype))
    wx_p = jnp.zeros((Ep, 4 * Hp), matmul_dtype)
    wh_p = jnp.zeros((Hp, 4 * Hp), matmul_dtype)
    b_p = jnp.zeros((1, 4 * Hp), f32)
    for g in range(4):                                   # gate order [i,f,g,o]
        wx_p = wx_p.at[:E, g * Hp:g * Hp + H].set(
            wx[:, g * H:(g + 1) * H].astype(matmul_dtype))
        wh_p = wh_p.at[:H, g * Hp:g * Hp + H].set(
            wh[:, g * H:(g + 1) * H].astype(matmul_dtype))
        b_p = b_p.at[:, g * Hp:g * Hp + H].set(
            b[:, g * H:(g + 1) * H].astype(f32))
    w1_p = jnp.zeros((Hp, F1p), matmul_dtype).at[:H, :F1].set(
        w1.astype(matmul_dtype))
    b1_p = jnp.zeros((1, F1p), f32).at[:, :F1].set(b1.astype(f32))
    w2_p = jnp.zeros((1, F1p), f32).at[:, :F1].set(w2.astype(f32))
    b2_p = b2.astype(f32)

    # ---- chunk sizing: MXU occupancy target + VMEM budget ------------------
    mm_bytes = jnp.dtype(matmul_dtype).itemsize
    # resident weights, double-buffered by the default pipeliner
    resident_bytes = 2 * mm_bytes * (Ep * 4 * Hp + Hp * 4 * Hp + Hp * F1p)
    if seq_chunk is None:
        chunk = min(S, max(1, pl.cdiv(256, Bt)))   # >=256 rows fills an MXU pass
        while S % chunk:
            chunk -= 1
        budget = 48 * 1024 * 1024                  # safe against v7x's 64 MiB

        def _fits(ch):
            return (resident_bytes
                    + 2 * ch * Bt * Ep * mm_bytes   # streamed x, double buffered
                    + ch * Bt * 4 * Hp * 4          # gates scratch (f32)
                    + 2 * Bt * Hp * 4) <= budget    # c / h scratch

        while chunk > 1 and not _fits(chunk):
            chunk -= 1
            while S % chunk:
                chunk -= 1
        seq_chunk = chunk
    assert S % seq_chunk == 0, "max_seq_len must be divisible by seq_chunk"
    n_chunks = S // seq_chunk

    # ---- exact replacement of one-hot @ embedding: gather rows, time-major --
    ids = jnp.pad(word_ids, ((0, Bp - B), (0, 0)))        # (Bp, S)
    x_all = jnp.take(emb_p, ids.T, axis=0)                # (S, Bp, Ep), mm dtype

    kernel = functools.partial(
        _review_classifier_kernel,
        seq_chunk=seq_chunk, bt=Bt, hidden_p=Hp,
        mm_dtype=matmul_dtype, unroll=min(seq_chunk, 8))

    resident = lambda shape: pl.BlockSpec(shape, lambda bi, si: (0,) * len(shape))

    vmem_est = (2 * seq_chunk * Bt * Ep * mm_bytes        # streamed x (2 bufs)
                + resident_bytes                          # Wx/Wh/W1 (2 bufs)
                + 2 * 4 * (4 * Hp + 2 * F1p + 1)          # small f32 residents
                + seq_chunk * Bt * 4 * Hp * 4             # gates scratch
                + 2 * Bt * Hp * 4                         # c / h scratch
                + 2 * Bt * 4)                             # out block
    vmem_limit = int(min(96 * 1024 * 1024, max(32 * 1024 * 1024, 2 * vmem_est)))

    out = pl.pallas_call(
        kernel,
        out_shape=jax.ShapeDtypeStruct((Bp, 1), jnp.float32),
        grid_spec=pltpu.PrefetchScalarGridSpec(
            num_scalar_prefetch=0,
            grid=(batch_tiles, n_chunks),
            in_specs=[
                # streamed activations: one (chunk, batch-tile) slab per step
                pl.BlockSpec((seq_chunk, Bt, Ep), lambda bi, si: (si, bi, 0)),
                resident((Ep, 4 * Hp)),      # Wx   (resident weights)
                resident((Hp, 4 * Hp)),      # Wh
                resident((1, 4 * Hp)),       # b
                resident((Hp, F1p)),         # W1
                resident((1, F1p)),          # b1
                resident((1, F1p)),          # W2 row
                resident((1, 1)),            # b2
            ],
            out_specs=pl.BlockSpec((Bt, 1), lambda bi, si: (bi, 0)),
            scratch_shapes=[
                pltpu.VMEM((seq_chunk * Bt, 4 * Hp), jnp.float32),  # gates_x
                pltpu.VMEM((Bt, Hp), jnp.float32),                  # c state
                pltpu.VMEM((Bt, Hp), jnp.float32),                  # h state
            ],
        ),
        compiler_params=pltpu.CompilerParams(
            dimension_semantics=("parallel", "arbitrary"),  # batch ∥, seq serial
            vmem_limit_bytes=vmem_limit),
    )(x_all, wx_p, wh_p, b_p, w1_p, b1_p, w2_p, b2_p)
    return out[:B]


def _reference_forward(word_ids, params):
    """Pure-JAX f32 reference mirroring the PyTorch forward."""
    emb, wx, wh, b, w1, b1, w2, b2 = params
    B, S = word_ids.shape
    H = wh.shape[0]
    c = jnp.zeros((B, H), jnp.float32)
    h = jnp.zeros((B, H), jnp.float32)
    for t in range(S):
        x = emb[word_ids[:, t]]
        gates = x @ wx + h @ wh + b
        i_g = jax.nn.sigmoid(gates[:, 0 * H:1 * H])
        f_g = jax.nn.sigmoid(gates[:, 1 * H:2 * H])
        g_g = jnp.tanh(gates[:, 2 * H:3 * H])
        o_g = jax.nn.sigmoid(gates[:, 3 * H:4 * H])
        c = f_g * c + i_g * g_g
        h = o_g * jnp.tanh(c)
    z = jnp.maximum(c @ w1 + b1, 0.0)
    return jax.nn.sigmoid(z @ w2.T + b2)


if __name__ == "__main__":
    # Small, deterministic shapes consistent with the module's forward.
    BATCH, SEQ, VOCAB, EMB, HIDDEN, FF = 8, 8, 128, 32, 32, 1024

    key = jax.random.PRNGKey(0)
    keys = jax.random.split(key, 10)

    word_ids = jax.random.randint(keys[0], (BATCH, SEQ), 0, VOCAB,
                                  dtype=jnp.int32)

    scale = 0.05
    params = (
        scale * jax.random.normal(keys[1], (VOCAB, EMB), jnp.float32),          # emb
        scale * jax.random.normal(keys[2], (EMB, 4 * HIDDEN), jnp.float32),     # Wx
        scale * jax.random.normal(keys[3], (HIDDEN, 4 * HIDDEN), jnp.float32),  # Wh
        scale * jax.random.normal(keys[4], (1, 4 * HIDDEN), jnp.float32),       # b
        scale * jax.random.normal(keys[5], (HIDDEN, FF), jnp.float32),          # W1
        scale * jax.random.normal(keys[6], (1, FF), jnp.float32),               # b1
        scale * jax.random.normal(keys[7], (1, FF), jnp.float32),               # W2
        scale * jax.random.normal(keys[8], (1, 1), jnp.float32),                # b2
    )

    ref = jax.block_until_ready(_reference_forward(word_ids, params))

    # 1) exactness check: f32 matmuls, seq_chunk=4 -> sequence streaming path.
    out_f32 = jax.block_until_ready(review_classifier_forward(
        word_ids, params, seq_chunk=4, batch_tiles=1,
        matmul_dtype=jnp.float32))
    assert out_f32.shape == (BATCH, 1), out_f32.shape
    assert jnp.allclose(out_f32, ref, atol=1e-4), (out_f32, ref)

    # 2) perf config: bf16 matmul operands, auto seq_chunk (MXU / VMEM budget).
    out_bf16 = jax.block_until_ready(review_classifier_forward(
        word_ids, params, matmul_dtype=jnp.bfloat16))
    assert jnp.allclose(out_bf16, ref, atol=1e-2), (out_bf16, ref)

    # 3) batch-tiled path ('parallel' leading axis, as used on v7x's 2 TCs).
    out_bt = jax.block_until_ready(review_classifier_forward(
        word_ids, params, seq_chunk=4, batch_tiles=2,
        matmul_dtype=jnp.bfloat16))
    assert jnp.allclose(out_bt, ref, atol=1e-2), (out_bt, ref)

    print("KERNEL_OK")
</pallas_src>

<mosaic_0001>
module attributes {stable_mosaic.version = 11 : i64} {
  func.func @_review_classifier_kernel(%arg0: i32, %arg1: i32, %arg2: memref<4x8x128xf32, #tpu.memory_space<vmem>>, %arg3: memref<128x512xf32, #tpu.memory_space<vmem>>, %arg4: memref<128x512xf32, #tpu.memory_space<vmem>>, %arg5: memref<1x512xf32, #tpu.memory_space<vmem>>, %arg6: memref<128x1024xf32, #tpu.memory_space<vmem>>, %arg7: memref<1x1024xf32, #tpu.memory_space<vmem>>, %arg8: memref<1x1024xf32, #tpu.memory_space<vmem>>, %arg9: memref<1x1xf32, #tpu.memory_space<vmem>>, %arg10: memref<8x1xf32, #tpu.memory_space<vmem>>, %arg11: memref<32x512xf32, #tpu.memory_space<vmem>>, %arg12: memref<8x128xf32, #tpu.memory_space<vmem>>, %arg13: memref<8x128xf32, #tpu.memory_space<vmem>>) attributes {dimension_semantics = [#tpu.dimension_semantics<parallel>, #tpu.dimension_semantics<arbitrary>], iteration_bounds = array<i64: 1, 2>, scalar_prefetch = 0 : i64, scratch_operands = 3 : i64, tpu.core_type = #tpu.core_type<tc>, window_params = [{transform_indices = @transform_0, window_bounds = array<i64: 4, 8, 128>}, {pipeline_mode = #tpu.pipeline_mode<synchronous>, transform_indices = @transform_1, window_bounds = array<i64: 128, 512>}, {pipeline_mode = #tpu.pipeline_mode<synchronous>, transform_indices = @transform_2, window_bounds = array<i64: 128, 512>}, {pipeline_mode = #tpu.pipeline_mode<synchronous>, transform_indices = @transform_3, window_bounds = array<i64: 1, 512>}, {pipeline_mode = #tpu.pipeline_mode<synchronous>, transform_indices = @transform_4, window_bounds = array<i64: 128, 1024>}, {pipeline_mode = #tpu.pipeline_mode<synchronous>, transform_indices = @transform_5, window_bounds = array<i64: 1, 1024>}, {pipeline_mode = #tpu.pipeline_mode<synchronous>, transform_indices = @transform_6, window_bounds = array<i64: 1, 1024>}, {pipeline_mode = #tpu.pipeline_mode<synchronous>, transform_indices = @transform_7, window_bounds = array<i64: 1, 1>}, {transform_indices = @transform_8, window_bounds = array<i64: 8, 1>}]} {
    %c0_i32 = arith.constant 0 : i32
    %0 = arith.cmpi eq, %arg1, %c0_i32 : i32
    %1 = arith.extui %0 : i1 to i32
    %c0_i32_0 = arith.constant 0 : i32
    %2 = arith.cmpi ne, %1, %c0_i32_0 : i32
    scf.if %2 {
      %cst_45 = arith.constant 0.000000e+00 : f32
      %143 = vector.broadcast %cst_45 : f32 to vector<8x128xf32>
      %c0_46 = arith.constant 0 : index
      %c0_47 = arith.constant 0 : index
      %144 = vector.load %arg12[%c0_46, %c0_47] : memref<8x128xf32, #tpu.memory_space<vmem>>, vector<8x128xf32>
      tpu.vector_store %arg12[%c0_46, %c0_47], %143 {strides = array<i32>} : memref<8x128xf32, #tpu.memory_space<vmem>>, vector<8x128xf32>,
      %cst_48 = arith.constant 0.000000e+00 : f32
      %145 = vector.broadcast %cst_48 : f32 to vector<8x128xf32>
      %c0_49 = arith.constant 0 : index
      %c0_50 = arith.constant 0 : index
      %146 = vector.load %arg13[%c0_49, %c0_50] : memref<8x128xf32, #tpu.memory_space<vmem>>, vector<8x128xf32>
      tpu.vector_store %arg13[%c0_49, %c0_50], %145 {strides = array<i32>} : memref<8x128xf32, #tpu.memory_space<vmem>>, vector<8x128xf32>,
    } else {
    }
    %c0 = arith.constant 0 : index
    %c0_1 = arith.constant 0 : index
    %c0_2 = arith.constant 0 : index
    %3 = vector.load %arg2[%c0, %c0_1, %c0_2] : memref<4x8x128xf32, #tpu.memory_space<vmem>>, vector<4x8x128xf32>
    %4 = vector.shape_cast %3 : vector<4x8x128xf32> to vector<32x128xf32>
    %c0_3 = arith.constant 0 : index
    %c0_4 = arith.constant 0 : index
    %5 = vector.load %arg3[%c0_3, %c0_4] : memref<128x512xf32, #tpu.memory_space<vmem>>, vector<128x512xf32>
    %cst = arith.constant dense<0.000000e+00> : vector<32x512xf32>
    %6 = tpu.matmul %4, %5, %cst {dimension_numbers = #tpu.dot_dimension_numbers<[1], [0], [0], [1], [0, 0, 1, 1], [], []>} : vector<32x128xf32>, vector<128x512xf32>, vector<32x512xf32> -> vector<32x512xf32>
    %c0_5 = arith.constant 0 : index
    %c0_6 = arith.constant 0 : index
    %7 = vector.load %arg5[%c0_5, %c0_6] : memref<1x512xf32, #tpu.memory_space<vmem>>, vector<1x512xf32>
    %8 = vector.broadcast %7 : vector<1x512xf32> to vector<32x512xf32>
    %9 = arith.addf %6, %8 : vector<32x512xf32>
    %c0_7 = arith.constant 0 : index
    %c0_8 = arith.constant 0 : index
    %10 = vector.load %arg11[%c0_7, %c0_8] : memref<32x512xf32, #tpu.memory_space<vmem>>, vector<32x512xf32>
    tpu.vector_store %arg11[%c0_7, %c0_8], %9 {strides = array<i32>} : memref<32x512xf32, #tpu.memory_space<vmem>>, vector<32x512xf32>,
    %c0_9 = arith.constant 0 : index
    %c0_10 = arith.constant 0 : index
    %11 = vector.load %arg4[%c0_9, %c0_10] : memref<128x512xf32, #tpu.memory_space<vmem>>, vector<128x512xf32>
    %c0_11 = arith.constant 0 : index
    %c0_12 = arith.constant 0 : index
    %12 = vector.load %arg12[%c0_11, %c0_12] : memref<8x128xf32, #tpu.memory_space<vmem>>, vector<8x128xf32>
    %c0_13 = arith.constant 0 : index
    %c0_14 = arith.constant 0 : index
    %13 = vector.load %arg13[%c0_13, %c0_14] : memref<8x128xf32, #tpu.memory_space<vmem>>, vector<8x128xf32>
    %c0_i32_15 = arith.constant 0 : i32
    %c8_i32 = arith.constant 8 : i32
    %14 = arith.muli %c0_i32_15, %c8_i32 : i32
    %15 = tpu.assume_multiple %14, 8 : i32
    %16 = arith.index_cast %15 : i32 to index
    %c0_16 = arith.constant 0 : index
    %17 = vector.load %arg11[%16, %c0_16] : memref<32x512xf32, #tpu.memory_space<vmem>>, vector<8x512xf32>
    %cst_17 = arith.constant dense<0.000000e+00> : vector<8x512xf32>
    %18 = tpu.matmul %13, %11, %cst_17 {dimension_numbers = #tpu.dot_dimension_numbers<[1], [0], [0], [1], [0, 0, 1, 1], [], []>} : vector<8x128xf32>, vector<128x512xf32>, vector<8x512xf32> -> vector<8x512xf32>
    %19 = arith.addf %17, %18 : vector<8x512xf32>
    %20 = vector.extract_strided_slice %19 {offsets = [0, 0], sizes = [8, 128], strides = [1, 1]} : vector<8x512xf32> to vector<8x128xf32>
    %21 = arith.negf %20 : vector<8x128xf32>
    %22 = math.exp %21 : vector<8x128xf32>
    %cst_18 = arith.constant 1.000000e+00 : f32
    %23 = vector.broadcast %cst_18 : f32 to vector<8x128xf32>
    %24 = arith.addf %23, %22 : vector<8x128xf32>
    %25 = arith.divf %23, %24 : vector<8x128xf32>
    %26 = vector.extract_strided_slice %19 {offsets = [0, 128], sizes = [8, 128], strides = [1, 1]} : vector<8x512xf32> to vector<8x128xf32>
    %27 = arith.negf %26 : vector<8x128xf32>
    %28 = math.exp %27 : vector<8x128xf32>
    %cst_19 = arith.constant 1.000000e+00 : f32
    %29 = vector.broadcast %cst_19 : f32 to vector<8x128xf32>
    %30 = arith.addf %29, %28 : vector<8x128xf32>
    %31 = arith.divf %29, %30 : vector<8x128xf32>
    %32 = vector.extract_strided_slice %19 {offsets = [0, 256], sizes = [8, 128], strides = [1, 1]} : vector<8x512xf32> to vector<8x128xf32>
    %33 = math.tanh %32 : vector<8x128xf32>
    %34 = vector.extract_strided_slice %19 {offsets = [0, 384], sizes = [8, 128], strides = [1, 1]} : vector<8x512xf32> to vector<8x128xf32>
    %35 = arith.negf %34 : vector<8x128xf32>
    %36 = math.exp %35 : vector<8x128xf32>
    %cst_20 = arith.constant 1.000000e+00 : f32
    %37 = vector.broadcast %cst_20 : f32 to vector<8x128xf32>
    %38 = arith.addf %37, %36 : vector<8x128xf32>
    %39 = arith.divf %37, %38 : vector<8x128xf32>
    %40 = arith.mulf %31, %12 : vector<8x128xf32>
    %41 = arith.mulf %25, %33 : vector<8x128xf32>
    %42 = arith.addf %40, %41 : vector<8x128xf32>
    %43 = math.tanh %42 : vector<8x128xf32>
    %44 = arith.mulf %39, %43 : vector<8x128xf32>
    %c1_i32 = arith.constant 1 : i32
    %c8_i32_21 = arith.constant 8 : i32
    %45 = arith.muli %c1_i32, %c8_i32_21 : i32
    %46 = tpu.assume_multiple %45, 8 : i32
    %47 = arith.index_cast %46 : i32 to index
    %c0_22 = arith.constant 0 : index
    %48 = vector.load %arg11[%47, %c0_22] : memref<32x512xf32, #tpu.memory_space<vmem>>, vector<8x512xf32>
    %cst_23 = arith.constant dense<0.000000e+00> : vector<8x512xf32>
    %49 = tpu.matmul %44, %11, %cst_23 {dimension_numbers = #tpu.dot_dimension_numbers<[1], [0], [0], [1], [0, 0, 1, 1], [], []>} : vector<8x128xf32>, vector<128x512xf32>, vector<8x512xf32> -> vector<8x512xf32>
    %50 = arith.addf %48, %49 : vector<8x512xf32>
    %51 = vector.extract_strided_slice %50 {offsets = [0, 0], sizes = [8, 128], strides = [1, 1]} : vector<8x512xf32> to vector<8x128xf32>
    %52 = arith.negf %51 : vector<8x128xf32>
    %53 = math.exp %52 : vector<8x128xf32>
    %cst_24 = arith.constant 1.000000e+00 : f32
    %54 = vector.broadcast %cst_24 : f32 to vector<8x128xf32>
    %55 = arith.addf %54, %53 : vector<8x128xf32>
    %56 = arith.divf %54, %55 : vector<8x128xf32>
    %57 = vector.extract_strided_slice %50 {offsets = [0, 128], sizes = [8, 128], strides = [1, 1]} : vector<8x512xf32> to vector<8x128xf32>
    %58 = arith.negf %57 : vector<8x128xf32>
    %59 = math.exp %58 : vector<8x128xf32>
    %cst_25 = arith.constant 1.000000e+00 : f32
    %60 = vector.broadcast %cst_25 : f32 to vector<8x128xf32>
    %61 = arith.addf %60, %59 : vector<8x128xf32>
    %62 = arith.divf %60, %61 : vector<8x128xf32>
    %63 = vector.extract_strided_slice %50 {offsets = [0, 256], sizes = [8, 128], strides = [1, 1]} : vector<8x512xf32> to vector<8x128xf32>
    %64 = math.tanh %63 : vector<8x128xf32>
    %65 = vector.extract_strided_slice %50 {offsets = [0, 384], sizes = [8, 128], strides = [1, 1]} : vector<8x512xf32> to vector<8x128xf32>
    %66 = arith.negf %65 : vector<8x128xf32>
    %67 = math.exp %66 : vector<8x128xf32>
    %cst_26 = arith.constant 1.000000e+00 : f32
    %68 = vector.broadcast %cst_26 : f32 to vector<8x128xf32>
    %69 = arith.addf %68, %67 : vector<8x128xf32>
    %70 = arith.divf %68, %69 : vector<8x128xf32>
    %71 = arith.mulf %62, %42 : vector<8x128xf32>
    %72 = arith.mulf %56, %64 : vector<8x128xf32>
    %73 = arith.addf %71, %72 : vector<8x128xf32>
    %74 = math.tanh %73 : vector<8x128xf32>
    %75 = arith.mulf %70, %74 : vector<8x128xf32>
    %c2_i32 = arith.constant 2 : i32
    %c8_i32_27 = arith.constant 8 : i32
    %76 = arith.muli %c2_i32, %c8_i32_27 : i32
    %77 = tpu.assume_multiple %76, 8 : i32
    %78 = arith.index_cast %77 : i32 to index
    %c0_28 = arith.constant 0 : index
    %79 = vector.load %arg11[%78, %c0_28] : memref<32x512xf32, #tpu.memory_space<vmem>>, vector<8x512xf32>
    %cst_29 = arith.constant dense<0.000000e+00> : vector<8x512xf32>
    %80 = tpu.matmul %75, %11, %cst_29 {dimension_numbers = #tpu.dot_dimension_numbers<[1], [0], [0], [1], [0, 0, 1, 1], [], []>} : vector<8x128xf32>, vector<128x512xf32>, vector<8x512xf32> -> vector<8x512xf32>
    %81 = arith.addf %79, %80 : vector<8x512xf32>
    %82 = vector.extract_strided_slice %81 {offsets = [0, 0], sizes = [8, 128], strides = [1, 1]} : vector<8x512xf32> to vector<8x128xf32>
    %83 = arith.negf %82 : vector<8x128xf32>
    %84 = math.exp %83 : vector<8x128xf32>
    %cst_30 = arith.constant 1.000000e+00 : f32
    %85 = vector.broadcast %cst_30 : f32 to vector<8x128xf32>
    %86 = arith.addf %85, %84 : vector<8x128xf32>
    %87 = arith.divf %85, %86 : vector<8x128xf32>
    %88 = vector.extract_strided_slice %81 {offsets = [0, 128], sizes = [8, 128], strides = [1, 1]} : vector<8x512xf32> to vector<8x128xf32>
    %89 = arith.negf %88 : vector<8x128xf32>
    %90 = math.exp %89 : vector<8x128xf32>
    %cst_31 = arith.constant 1.000000e+00 : f32
    %91 = vector.broadcast %cst_31 : f32 to vector<8x128xf32>
    %92 = arith.addf %91, %90 : vector<8x128xf32>
    %93 = arith.divf %91, %92 : vector<8x128xf32>
    %94 = vector.extract_strided_slice %81 {offsets = [0, 256], sizes = [8, 128], strides = [1, 1]} : vector<8x512xf32> to vector<8x128xf32>
    %95 = math.tanh %94 : vector<8x128xf32>
    %96 = vector.extract_strided_slice %81 {offsets = [0, 384], sizes = [8, 128], strides = [1, 1]} : vector<8x512xf32> to vector<8x128xf32>
    %97 = arith.negf %96 : vector<8x128xf32>
    %98 = math.exp %97 : vector<8x128xf32>
    %cst_32 = arith.constant 1.000000e+00 : f32
    %99 = vector.broadcast %cst_32 : f32 to vector<8x128xf32>
    %100 = arith.addf %99, %98 : vector<8x128xf32>
    %101 = arith.divf %99, %100 : vector<8x128xf32>
    %102 = arith.mulf %93, %73 : vector<8x128xf32>
    %103 = arith.mulf %87, %95 : vector<8x128xf32>
    %104 = arith.addf %102, %103 : vector<8x128xf32>
    %105 = math.tanh %104 : vector<8x128xf32>
    %106 = arith.mulf %101, %105 : vector<8x128xf32>
    %c3_i32 = arith.constant 3 : i32
    %c8_i32_33 = arith.constant 8 : i32
    %107 = arith.muli %c3_i32, %c8_i32_33 : i32
    %108 = tpu.assume_multiple %107, 8 : i32
    %109 = arith.index_cast %108 : i32 to index
    %c0_34 = arith.constant 0 : index
    %110 = vector.load %arg11[%109, %c0_34] : memref<32x512xf32, #tpu.memory_space<vmem>>, vector<8x512xf32>
    %cst_35 = arith.constant dense<0.000000e+00> : vector<8x512xf32>
    %111 = tpu.matmul %106, %11, %cst_35 {dimension_numbers = #tpu.dot_dimension_numbers<[1], [0], [0], [1], [0, 0, 1, 1], [], []>} : vector<8x128xf32>, vector<128x512xf32>, vector<8x512xf32> -> vector<8x512xf32>
    %112 = arith.addf %110, %111 : vector<8x512xf32>
    %113 = vector.extract_strided_slice %112 {offsets = [0, 0], sizes = [8, 128], strides = [1, 1]} : vector<8x512xf32> to vector<8x128xf32>
    %114 = arith.negf %113 : vector<8x128xf32>
    %115 = math.exp %114 : vector<8x128xf32>
    %cst_36 = arith.constant 1.000000e+00 : f32
    %116 = vector.broadcast %cst_36 : f32 to vector<8x128xf32>
    %117 = arith.addf %116, %115 : vector<8x128xf32>
    %118 = arith.divf %116, %117 : vector<8x128xf32>
    %119 = vector.extract_strided_slice %112 {offsets = [0, 128], sizes = [8, 128], strides = [1, 1]} : vector<8x512xf32> to vector<8x128xf32>
    %120 = arith.negf %119 : vector<8x128xf32>
    %121 = math.exp %120 : vector<8x128xf32>
    %cst_37 = arith.constant 1.000000e+00 : f32
    %122 = vector.broadcast %cst_37 : f32 to vector<8x128xf32>
    %123 = arith.addf %122, %121 : vector<8x128xf32>
    %124 = arith.divf %122, %123 : vector<8x128xf32>
    %125 = vector.extract_strided_slice %112 {offsets = [0, 256], sizes = [8, 128], strides = [1, 1]} : vector<8x512xf32> to vector<8x128xf32>
    %126 = math.tanh %125 : vector<8x128xf32>
    %127 = vector.extract_strided_slice %112 {offsets = [0, 384], sizes = [8, 128], strides = [1, 1]} : vector<8x512xf32> to vector<8x128xf32>
    %128 = arith.negf %127 : vector<8x128xf32>
    %129 = math.exp %128 : vector<8x128xf32>
    %cst_38 = arith.constant 1.000000e+00 : f32
    %130 = vector.broadcast %cst_38 : f32 to vector<8x128xf32>
    %131 = arith.addf %130, %129 : vector<8x128xf32>
    %132 = arith.divf %130, %131 : vector<8x128xf32>
    %133 = arith.mulf %124, %104 : vector<8x128xf32>
    %134 = arith.mulf %118, %126 : vector<8x128xf32>
    %135 = arith.addf %133, %134 : vector<8x128xf32>
    %136 = math.tanh %135 : vector<8x128xf32>
    %137 = arith.mulf %132, %136 : vector<8x128xf32>
    %c4_i32 = arith.constant 4 : i32
    %c0_39 = arith.constant 0 : index
    %c0_40 = arith.constant 0 : index
    %138 = vector.load %arg12[%c0_39, %c0_40] : memref<8x128xf32, #tpu.memory_space<vmem>>, vector<8x128xf32>
    tpu.vector_store %arg12[%c0_39, %c0_40], %135 {strides = array<i32>} : memref<8x128xf32, #tpu.memory_space<vmem>>, vector<8x128xf32>,
    %c0_41 = arith.constant 0 : index
    %c0_42 = arith.constant 0 : index
    %139 = vector.load %arg13[%c0_41, %c0_42] : memref<8x128xf32, #tpu.memory_space<vmem>>, vector<8x128xf32>
    tpu.vector_store %arg13[%c0_41, %c0_42], %137 {strides = array<i32>} : memref<8x128xf32, #tpu.memory_space<vmem>>, vector<8x128xf32>,
    %c1_i32_43 = arith.constant 1 : i32
    %140 = arith.cmpi eq, %arg1, %c1_i32_43 : i32
    %141 = arith.extui %140 : i1 to i32
    %c0_i32_44 = arith.constant 0 : i32
    %142 = arith.cmpi ne, %141, %c0_i32_44 : i32
    scf.if %142 {
      %c0_45 = arith.constant 0 : index
      %c0_46 = arith.constant 0 : index
      %143 = vector.load %arg6[%c0_45, %c0_46] : memref<128x1024xf32, #tpu.memory_space<vmem>>, vector<128x1024xf32>
      %cst_47 = arith.constant dense<0.000000e+00> : vector<8x1024xf32>
      %144 = tpu.matmul %135, %143, %cst_47 {dimension_numbers = #tpu.dot_dimension_numbers<[1], [0], [0], [1], [0, 0, 1, 1], [], []>} : vector<8x128xf32>, vector<128x1024xf32>, vector<8x1024xf32> -> vector<8x1024xf32>
      %c0_48 = arith.constant 0 : index
      %c0_49 = arith.constant 0 : index
      %145 = vector.load %arg7[%c0_48, %c0_49] : memref<1x1024xf32, #tpu.memory_space<vmem>>, vector<1x1024xf32>
      %146 = vector.broadcast %145 : vector<1x1024xf32> to vector<8x1024xf32>
      %147 = arith.addf %144, %146 : vector<8x1024xf32>
      %cst_50 = arith.constant 0.000000e+00 : f32
      %148 = vector.broadcast %cst_50 : f32 to vector<8x1024xf32>
      %149 = arith.maximumf %147, %148 : vector<8x1024xf32>
      %c0_51 = arith.constant 0 : index
      %c0_52 = arith.constant 0 : index
      %150 = vector.load %arg8[%c0_51, %c0_52] : memref<1x1024xf32, #tpu.memory_space<vmem>>, vector<1x1024xf32>
      %151 = vector.broadcast %150 : vector<1x1024xf32> to vector<8x1024xf32>
      %152 = arith.mulf %149, %151 : vector<8x1024xf32>
      %cst_53 = arith.constant dense<0.000000e+00> : vector<8xf32>
      %153 = vector.multi_reduction <add>, %152, %cst_53 [1] : vector<8x1024xf32> to vector<8xf32>
      %154 = vector.shape_cast %153 : vector<8xf32> to vector<8x1xf32>
      %c0_54 = arith.constant 0 : index
      %c0_55 = arith.constant 0 : index
      %155 = vector.load %arg9[%c0_54, %c0_55] : memref<1x1xf32, #tpu.memory_space<vmem>>, vector<1x1xf32>
      %156 = vector.broadcast %155 : vector<1x1xf32> to vector<8x1xf32>
      %157 = arith.addf %154, %156 : vector<8x1xf32>
      %158 = arith.negf %157 : vector<8x1xf32>
      %159 = math.exp %158 : vector<8x1xf32>
      %cst_56 = arith.constant 1.000000e+00 : f32
      %160 = vector.broadcast %cst_56 : f32 to vector<8x1xf32>
      %161 = arith.addf %160, %159 : vector<8x1xf32>
      %162 = arith.divf %160, %161 : vector<8x1xf32>
      %c0_57 = arith.constant 0 : index
      %c0_58 = arith.constant 0 : index
      %163 = vector.load %arg10[%c0_57, %c0_58] : memref<8x1xf32, #tpu.memory_space<vmem>>, vector<8x1xf32>
      tpu.vector_store %arg10[%c0_57, %c0_58], %162 {strides = array<i32>} : memref<8x1xf32, #tpu.memory_space<vmem>>, vector<8x1xf32>,
    } else {
    }
    return
  }
  func.func @transform_0(%arg0: i32, %arg1: i32) -> (i32, i32, i32) {
    %c0_i32 = arith.constant 0 : i32
    %c0_i32_0 = arith.constant 0 : i32
    return %arg1, %arg0, %c0_i32 : i32, i32, i32
  }
  func.func @transform_1(%arg0: i32, %arg1: i32) -> (i32, i32) {
    %c0_i32 = arith.constant 0 : i32
    %c0_i32_0 = arith.constant 0 : i32
    %c0_i32_1 = arith.constant 0 : i32
    return %c0_i32, %c0_i32_0 : i32, i32
  }
  func.func @transform_2(%arg0: i32, %arg1: i32) -> (i32, i32) {
    %c0_i32 = arith.constant 0 : i32
    %c0_i32_0 = arith.constant 0 : i32
    %c0_i32_1 = arith.constant 0 : i32
    return %c0_i32, %c0_i32_0 : i32, i32
  }
  func.func @transform_3(%arg0: i32, %arg1: i32) -> (i32, i32) {
    %c0_i32 = arith.constant 0 : i32
    %c0_i32_0 = arith.constant 0 : i32
    %c0_i32_1 = arith.constant 0 : i32
    return %c0_i32, %c0_i32_0 : i32, i32
  }
  func.func @transform_4(%arg0: i32, %arg1: i32) -> (i32, i32) {
    %c0_i32 = arith.constant 0 : i32
    %c0_i32_0 = arith.constant 0 : i32
    %c0_i32_1 = arith.constant 0 : i32
    return %c0_i32, %c0_i32_0 : i32, i32
  }
  func.func @transform_5(%arg0: i32, %arg1: i32) -> (i32, i32) {
    %c0_i32 = arith.constant 0 : i32
    %c0_i32_0 = arith.constant 0 : i32
    %c0_i32_1 = arith.constant 0 : i32
    return %c0_i32, %c0_i32_0 : i32, i32
  }
  func.func @transform_6(%arg0: i32, %arg1: i32) -> (i32, i32) {
    %c0_i32 = arith.constant 0 : i32
    %c0_i32_0 = arith.constant 0 : i32
    %c0_i32_1 = arith.constant 0 : i32
    return %c0_i32, %c0_i32_0 : i32, i32
  }
  func.func @transform_7(%arg0: i32, %arg1: i32) -> (i32, i32) {
    %c0_i32 = arith.constant 0 : i32
    %c0_i32_0 = arith.constant 0 : i32
    %c0_i32_1 = arith.constant 0 : i32
    return %c0_i32, %c0_i32_0 : i32, i32
  }
  func.func @transform_8(%arg0: i32, %arg1: i32) -> (i32, i32) {
    %c0_i32 = arith.constant 0 : i32
    %c0_i32_0 = arith.constant 0 : i32
    return %arg0, %c0_i32 : i32, i32
  }
}

</mosaic_0001>

<llo_original>
// kernel: tpu_custom_call.1
$region0: #{tpu_custom_call.1}
  #allocation0 [shape = 'u32[]', space=smem, size = 0x4, offset = 0x4, fixed_abs, tag = 'smem constant byte address 0x4 - core index']
  #allocation1 [shape = 'u32[144,128]{1,0:T(1,128)}', space=vmem, size = 0x12000, scoped, tag = 'internal scratch']
  #allocation2 [shape = 'f32[32,512]{1,0:T(8,128)}', space=vmem, size = 0x10000, scoped, tag = 'scratch operand']
  #allocation3 [shape = 'f32[8,128]{1,0:T(8,128)}', space=vmem, size = 0x1000, scoped, tag = 'scratch operand']
  #allocation4 [shape = 'f32[8,128]{1,0:T(8,128)}', space=vmem, size = 0x1000, scoped, tag = 'scratch operand']
  #allocation5 [shape = 'f32[1,1]{1,0:T(1,128)S(1)}', space=vmem, size = 0x200, scoped, tag = 'scoped memory for tpu_custom_call.1']
  %s0 = inlined_call_operand.hbm [shape: f32[8,8,128], index: 0, kind: input, shape index: {}]
  %s1 = inlined_call_operand.hbm [shape: f32[128,512], index: 1, kind: input, shape index: {}]
  %s2 = inlined_call_operand.hbm [shape: f32[128,512], index: 2, kind: input, shape index: {}]
  %s3 = inlined_call_operand.hbm [shape: f32[1,512], index: 3, kind: input, shape index: {}]
  %s4 = inlined_call_operand.hbm [shape: f32[128,1024], index: 4, kind: input, shape index: {}]
  %s5 = inlined_call_operand.vmem [shape: f32[1,1024], index: 5, kind: input, shape index: {}]
  %s6 = inlined_call_operand.vmem [shape: f32[1,1024], index: 6, kind: input, shape index: {}]
  %s7 = inlined_call_operand.<no memory space> [shape: f32[1,1], index: 7, kind: input, shape index: {}]
  %s8 = inlined_call_operand.vmem [shape: f32[8,1], index: 8, kind: output, shape index: {}]
  %s9 = sld [smem:[#allocation0]]
  $region93: #{tpu_custom_call.1} parent=0
    _
  %s11 = ssub.s32 1, %s9
  %s12 = scalar_select 0, %s11, %s9
  %v13 = vstv %s7
  %14 = vst [vmem:[#allocation5] sm:$0x1] %v13
  $region1: #{tpu_custom_call.1} parent=0
    #allocation6 [shape = 'u8[32768]{0}', space=vmem, size = 0x8000, scoped, tag = 'input window, operand 0']
    #allocation7 [shape = 's32[2]{0}', space=sflag, size = 0x8, scoped, tag = 'scoped memory for tpu_custom_call.1']
    #allocation8 [shape = 'u8[262144]{0}', space=vmem, size = 0x40000, scoped, tag = 'input window, operand 1, single buffered']
    #allocation9 [shape = 's32[1]{0}', space=sflag, size = 0x4, scoped, tag = 'scoped memory for tpu_custom_call.1']
    #allocation10 [shape = 'u8[262144]{0}', space=vmem, size = 0x40000, scoped, tag = 'input window, operand 2, single buffered']
    #allocation11 [shape = 'u8[2048]{0}', space=vmem, size = 0x800, scoped, tag = 'input window, operand 3, single buffered']
    #allocation12 [shape = 's32[1]{0}', space=sflag, size = 0x4, scoped, tag = 'scoped memory for tpu_custom_call.1']
    #allocation13 [shape = 'u8[524288]{0}', space=vmem, size = 0x80000, scoped, tag = 'input window, operand 4, single buffered']
    %15 = vsyncpa [#allocation7], 0
    %s16 = scalar_lea.sflag [#allocation7], 1
    %17 = vsyncpa %s16, 0
    %18 = vsyncpa [#allocation9], 0
    %19 = vsyncpa [#allocation12], 0
    loop: start=0, step=1, limit=4
    $region2: #{tpu_custom_call.1} parent=1 // loop_pre_header
      _
    $region3: #{tpu_custom_call.1} parent=1 // loop_header
      %s21 = sphi 0, %s25
      %p22 = scmp.ge.s32.totalorder %s21, 4
      %s28 = sphi 0, %s40
      %s29 = sphi 0, %s36
      %s30 = sphi 0, %s28
      %s31 = sphi 0, %s29
      %s32 = sphi 0, %s30
      %s33 = sphi 0, %s31
      %s45 = sphi 0, %s47
      %s48 = sphi 0, %s45
      %s49 = sphi 0, %s48
      %s65 = sphi 0, %s49
      %s69 = sphi 0, %s69
      %s71 = sphi 0, %s69
      %s72 = sphi 0, %s71
      %s86 = sphi 0, %s72
      %s90 = sphi 0, %s90
      %s92 = sphi 0, %s90
      %s93 = sphi 0, %s92
      %s107 = sphi 0, %s93
      %s111 = sphi 0, %s111
      %s113 = sphi 0, %s111
      %s114 = sphi 0, %s113
      %s128 = sphi 0, %s114
      %s132 = sphi 0, %s132
      %s134 = sphi 0, %s132
      %s135 = sphi 0, %s134
      %s149 = sphi 0, %s135
      %s153 = sphi 0, %s153
      %s155 = sphi 0, %s153
      %s156 = sphi 0, %s155
      %s170 = sphi 0, %s156
      %s174 = sphi 0, %s174
      %s176 = sphi 0, %s174
      %s177 = sphi 0, %s176
      %s191 = sphi 0, %s177
      %s195 = sphi 0, %s195
      %s197 = sphi 0, %s195
      %s198 = sphi 0, %s197
      %s212 = sphi 0, %s198
      %s218 = sphi 0, %s220
      %s221 = sphi 0, %s218
      %s222 = sphi 0, %s221
      %s238 = sphi 0, %s222
    $region4: #{tpu_custom_call.1} parent=1 // loop_header_branch
      %24 = sbr.rel (%p22) target = $region8
    $region5: #{tpu_custom_call.1} parent=1 // loop_body
      %s26 = ssub.s32 %s21, 1
      %s27 = ssub.s32 %s21, 2
      %s34 = sadd.s32 1, %s29
      %p35 = scmp.ge.s32.totalorder %s34, 2
      %s36 = scalar_select %p35, 0, %s34
      %s37 = sadd.s32 1, %s28
      %s38 = scalar_select %p35, %s37, %s28
      %p39 = scmp.ge.s32.totalorder %s38, 1
      %s40 = scalar_select %p39, 0, %s38
      %s41 = ssub.s32 %s29, %s36
      %s42 = ssub.s32 %s28, %s40
      %s43 = sor.u32 %s41, %s42
      %p44 = scmp.eq.s32.totalorder %s43, 0
      %s46 = sadd.s32 %s45, 1
      %s47 = scalar_select %p44, %s45, %s46
      %p50 = pneg %p44
      %p51 = scmp.eq.s32.totalorder %s21, 1
      %p52 = por %p50, %p51
      %p53 = scmp.ne.s32.totalorder %s45, %s48
      %p54 = scmp.eq.s32.totalorder %s21, 0
      %p55 = por %p53, %p54
      %p56 = scmp.ne.s32.totalorder %s45, %s48
      %p57 = scmp.eq.s32.totalorder %s26, 1
      %p58 = por %p56, %p57
      %p59 = scmp.ne.s32.totalorder %s48, %s49
      %p60 = scmp.eq.s32.totalorder %s26, 0
      %p61 = por %p59, %p60
      %p62 = scmp.ne.s32.totalorder %s48, %s49
      %p63 = scmp.eq.s32.totalorder %s27, 1
      %p64 = por %p62, %p63
      %p66 = scmp.ne.s32.totalorder %s49, %s65
      %p67 = scmp.eq.s32.totalorder %s27, 0
      %p68 = por %p66, %p67
      %s70 = sadd.s32 %s69, 1
      %p73 = scmp.eq.s32.totalorder %s21, 1
      %p74 = scmp.ne.s32.totalorder %s69, %s71
      %p75 = scmp.eq.s32.totalorder %s21, 0
      %p76 = por %p74, %p75
      %p77 = scmp.ne.s32.totalorder %s69, %s71
      %p78 = scmp.eq.s32.totalorder %s26, 1
      %p79 = por %p77, %p78
      %p80 = scmp.ne.s32.totalorder %s71, %s72
      %p81 = scmp.eq.s32.totalorder %s26, 0
      %p82 = por %p80, %p81
      %p83 = scmp.ne.s32.totalorder %s71, %s72
      %p84 = scmp.eq.s32.totalorder %s27, 1
      %p85 = por %p83, %p84
      %p87 = scmp.ne.s32.totalorder %s72, %s86
      %p88 = scmp.eq.s32.totalorder %s27, 0
      %p89 = por %p87, %p88
      %s91 = sadd.s32 %s90, 1
      %p94 = scmp.eq.s32.totalorder %s21, 1
      %p95 = scmp.ne.s32.totalorder %s90, %s92
      %p96 = scmp.eq.s32.totalorder %s21, 0
      %p97 = por %p95, %p96
      %p98 = scmp.ne.s32.totalorder %s90, %s92
      %p99 = scmp.eq.s32.totalorder %s26, 1
      %p100 = por %p98, %p99
      %p101 = scmp.ne.s32.totalorder %s92, %s93
      %p102 = scmp.eq.s32.totalorder %s26, 0
      %p103 = por %p101, %p102
      %p104 = scmp.ne.s32.totalorder %s92, %s93
      %p105 = scmp.eq.s32.totalorder %s27, 1
      %p106 = por %p104, %p105
      %p108 = scmp.ne.s32.totalorder %s93, %s107
      %p109 = scmp.eq.s32.totalorder %s27, 0
      %p110 = por %p108, %p109
      %s112 = sadd.s32 %s111, 1
      %p115 = scmp.eq.s32.totalorder %s21, 1
      %p116 = scmp.ne.s32.totalorder %s111, %s113
      %p117 = scmp.eq.s32.totalorder %s21, 0
      %p118 = por %p116, %p117
      %p119 = scmp.ne.s32.totalorder %s111, %s113
      %p120 = scmp.eq.s32.totalorder %s26, 1
      %p121 = por %p119, %p120
      %p122 = scmp.ne.s32.totalorder %s113, %s114
      %p123 = scmp.eq.s32.totalorder %s26, 0
      %p124 = por %p122, %p123
      %p125 = scmp.ne.s32.totalorder %s113, %s114
      %p126 = scmp.eq.s32.totalorder %s27, 1
      %p127 = por %p125, %p126
      %p129 = scmp.ne.s32.totalorder %s114, %s128
      %p130 = scmp.eq.s32.totalorder %s27, 0
      %p131 = por %p129, %p130
      %s133 = sadd.s32 %s132, 1
      %p136 = scmp.eq.s32.totalorder %s21, 1
      %p137 = scmp.ne.s32.totalorder %s132, %s134
      %p138 = scmp.eq.s32.totalorder %s21, 0
      %p139 = por %p137, %p138
      %p140 = scmp.ne.s32.totalorder %s132, %s134
      %p141 = scmp.eq.s32.totalorder %s26, 1
      %p142 = por %p140, %p141
      %p143 = scmp.ne.s32.totalorder %s134, %s135
      %p144 = scmp.eq.s32.totalorder %s26, 0
      %p145 = por %p143, %p144
      %p146 = scmp.ne.s32.totalorder %s134, %s135
      %p147 = scmp.eq.s32.totalorder %s27, 1
      %p148 = por %p146, %p147
      %p150 = scmp.ne.s32.totalorder %s135, %s149
      %p151 = scmp.eq.s32.totalorder %s27, 0
      %p152 = por %p150, %p151
      %s154 = sadd.s32 %s153, 1
      %p157 = scmp.eq.s32.totalorder %s21, 1
      %p158 = scmp.ne.s32.totalorder %s153, %s155
      %p159 = scmp.eq.s32.totalorder %s21, 0
      %p160 = por %p158, %p159
      %p161 = scmp.ne.s32.totalorder %s153, %s155
      %p162 = scmp.eq.s32.totalorder %s26, 1
      %p163 = por %p161, %p162
      %p164 = scmp.ne.s32.totalorder %s155, %s156
      %p165 = scmp.eq.s32.totalorder %s26, 0
      %p166 = por %p164, %p165
      %p167 = scmp.ne.s32.totalorder %s155, %s156
      %p168 = scmp.eq.s32.totalorder %s27, 1
      %p169 = por %p167, %p168
      %p171 = scmp.ne.s32.totalorder %s156, %s170
      %p172 = scmp.eq.s32.totalorder %s27, 0
      %p173 = por %p171, %p172
      %s175 = sadd.s32 %s174, 1
      %p178 = scmp.eq.s32.totalorder %s21, 1
      %p179 = scmp.ne.s32.totalorder %s174, %s176
      %p180 = scmp.eq.s32.totalorder %s21, 0
      %p181 = por %p179, %p180
      %p182 = scmp.ne.s32.totalorder %s174, %s176
      %p183 = scmp.eq.s32.totalorder %s26, 1
      %p184 = por %p182, %p183
      %p185 = scmp.ne.s32.totalorder %s176, %s177
      %p186 = scmp.eq.s32.totalorder %s26, 0
      %p187 = por %p185, %p186
      %p188 = scmp.ne.s32.totalorder %s176, %s177
      %p189 = scmp.eq.s32.totalorder %s27, 1
      %p190 = por %p188, %p189
      %p192 = scmp.ne.s32.totalorder %s177, %s191
      %p193 = scmp.eq.s32.totalorder %s27, 0
      %p194 = por %p192, %p193
      %s196 = sadd.s32 %s195, 1
      %p199 = scmp.eq.s32.totalorder %s21, 1
      %p200 = scmp.ne.s32.totalorder %s195, %s197
      %p201 = scmp.eq.s32.totalorder %s21, 0
      %p202 = por %p200, %p201
      %p203 = scmp.ne.s32.totalorder %s195, %s197
      %p204 = scmp.eq.s32.totalorder %s26, 1
      %p205 = por %p203, %p204
      %p206 = scmp.ne.s32.totalorder %s197, %s198
      %p207 = scmp.eq.s32.totalorder %s26, 0
      %p208 = por %p206, %p207
      %p209 = scmp.ne.s32.totalorder %s197, %s198
      %p210 = scmp.eq.s32.totalorder %s27, 1
      %p211 = por %p209, %p210
      %p213 = scmp.ne.s32.totalorder %s198, %s212
      %p214 = scmp.eq.s32.totalorder %s27, 0
      %p215 = por %p213, %p214
      %s216 = ssub.s32 %s28, %s40
      %p217 = scmp.eq.s32.totalorder %s216, 0
      %s219 = sadd.s32 %s218, 1
      %s220 = scalar_select %p217, %s218, %s219
      %p223 = pneg %p217
      %p224 = scmp.eq.s32.totalorder %s21, 1
      %p225 = por %p223, %p224
      %p226 = scmp.ne.s32.totalorder %s218, %s221
      %p227 = scmp.eq.s32.totalorder %s21, 0
      %p228 = por %p226, %p227
      %p229 = scmp.ne.s32.totalorder %s218, %s221
      %p230 = scmp.eq.s32.totalorder %s26, 1
      %p231 = por %p229, %p230
      %p232 = scmp.ne.s32.totalorder %s221, %s222
      %p233 = scmp.eq.s32.totalorder %s26, 0
      %p234 = por %p232, %p233
      %p235 = scmp.ne.s32.totalorder %s221, %s222
      %p236 = scmp.eq.s32.totalorder %s27, 1
      %p237 = por %p235, %p236
      %p239 = scmp.ne.s32.totalorder %s222, %s238
      %p240 = scmp.eq.s32.totalorder %s27, 0
      %p241 = por %p239, %p240
      %p242 = scmp.le.s32.totalorder 1, %s21
      %p243 = scmp.lt.s32.totalorder %s21, 3
      %p244 = pnand %p242, %p243
      %p245 = pneg %p244
      // Predicated region
      $region9: #{tpu_custom_call.1} parent=5 // pred_check
        _
      $region10: #{tpu_custom_call.1} parent=5 // pred_check_branch
        %247 = sbr.rel (%p244) target = $region12
      $region11: #{tpu_custom_call.1} parent=5 // pred_region
        %s248 = ssub.s32 %s21, 1
        // Predicated region
        $region13: #{tpu_custom_call.1} parent=11 // pred_check
          %p249 = pneg %p82
        $region14: #{tpu_custom_call.1} parent=11 // pred_check_branch
          %251 = sbr.rel (%p249) target = $region16
        $region15: #{tpu_custom_call.1} parent=11 // pred_region
          %s253 = ssub.s32 8192, 8192
          %254 = vsyncadd [#allocation9], %s253
          %s255 = sshll.u32 [#allocation8], 4
          %s256 = int_to_ptr.vmem [resolvable:$true] %s255
          %261 = dma.hbm_to_vmem [thread:$0]  %s1, 8192, %s256, [#allocation9], 512, 512, 32
        $region16: #{tpu_custom_call.1} parent=11 // pred_fallthru
          _
        // Predicated region
        $region17: #{tpu_custom_call.1} parent=11 // pred_check
          %p262 = pneg %p103
        $region18: #{tpu_custom_call.1} parent=11 // pred_check_branch
          %264 = sbr.rel (%p262) target = $region20
        $region19: #{tpu_custom_call.1} parent=11 // pred_region
          %s266 = ssub.s32 8192, 8192
          %267 = vsyncadd [#allocation9], %s266
          %s268 = sshll.u32 [#allocation10], 4
          %s269 = int_to_ptr.vmem [resolvable:$true] %s268
          %274 = dma.hbm_to_vmem [thread:$0]  %s2, 8192, %s269, [#allocation9], 512, 512, 32
        $region20: #{tpu_custom_call.1} parent=11 // pred_fallthru
          _
        // Predicated region
        $region21: #{tpu_custom_call.1} parent=11 // pred_check
          %p275 = pneg %p124
        $region22: #{tpu_custom_call.1} parent=11 // pred_check_branch
          %277 = sbr.rel (%p275) target = $region24
        $region23: #{tpu_custom_call.1} parent=11 // pred_region
          %s279 = ssub.s32 64, 64
          %280 = vsyncadd [#allocation12], %s279
          %s282 = sshll.u32 [#allocation11], 4
          %s283 = int_to_ptr.vmem [resolvable:$true] %s282
          %285 = dma.hbm_to_vmem [thread:$0]  %s3, 64, %s283, [#allocation12]
        $region24: #{tpu_custom_call.1} parent=11 // pred_fallthru
          _
        // Predicated region
        $region25: #{tpu_custom_call.1} parent=11 // pred_check
          %p286 = pneg %p145
        $region26: #{tpu_custom_call.1} parent=11 // pred_check_branch
          %288 = sbr.rel (%p286) target = $region28
        $region27: #{tpu_custom_call.1} parent=11 // pred_region
          %s290 = ssub.s32 16384, 16384
          %291 = vsyncadd [#allocation12], %s290
          %s292 = sshll.u32 [#allocation13], 4
          %s293 = int_to_ptr.vmem [resolvable:$true] %s292
          %298 = dma.hbm_to_vmem [thread:$0]  %s4, 16384, %s293, [#allocation12], 1024, 1024, 64
        $region28: #{tpu_custom_call.1} parent=11 // pred_fallthru
          _
        // Predicated region
        $region29: #{tpu_custom_call.1} parent=11 // pred_check
          %p299 = pneg %p166
        $region30: #{tpu_custom_call.1} parent=11 // pred_check_branch
          %301 = sbr.rel (%p299) target = $region32
        $region31: #{tpu_custom_call.1} parent=11 // pred_region
          _
        $region32: #{tpu_custom_call.1} parent=11 // pred_fallthru
          _
        // Predicated region
        $region33: #{tpu_custom_call.1} parent=11 // pred_check
          %p302 = pneg %p187
        $region34: #{tpu_custom_call.1} parent=11 // pred_check_branch
          %304 = sbr.rel (%p302) target = $region36
        $region35: #{tpu_custom_call.1} parent=11 // pred_region
          _
        $region36: #{tpu_custom_call.1} parent=11 // pred_fallthru
          _
        // Predicated region
        $region37: #{tpu_custom_call.1} parent=11 // pred_check
          %p305 = pneg %p208
        $region38: #{tpu_custom_call.1} parent=11 // pred_check_branch
          %307 = sbr.rel (%p305) target = $region40
        $region39: #{tpu_custom_call.1} parent=11 // pred_region
          _
        $region40: #{tpu_custom_call.1} parent=11 // pred_fallthru
          _
      $region12: #{tpu_custom_call.1} parent=5 // pred_fallthru
        _
      %p308 = scmp.lt.s32.totalorder %s21, 2
      // Predicated region
      $region41: #{tpu_custom_call.1} parent=5 // pred_check
        %p309 = pneg %p308
      $region42: #{tpu_custom_call.1} parent=5 // pred_check_branch
        %311 = sbr.rel (%p309) target = $region44
      $region43: #{tpu_custom_call.1} parent=5 // pred_region
        // Predicated region
        $region45: #{tpu_custom_call.1} parent=43 // pred_check
          %p312 = pneg %p55
        $region46: #{tpu_custom_call.1} parent=43 // pred_check_branch
          %314 = sbr.rel (%p312) target = $region48
        $region47: #{tpu_custom_call.1} parent=43 // pred_region
          %s315 = sand.u32 %s45, 1
          %s316 = scalar_lea.sflag [#allocation7], %s315
          %s317 = sand.u32 %s45, 1
          %s318 = smul.addr %s317, 32
          %s319 = scalar_lea.vmem [#allocation6], %s318
          %s320 = smul.u32 4, %s29
          %s322 = ssub.s32 512, 512
          %323 = vsyncadd %s316, %s322
          %s324 = sadd.s32 %s28, %s320
          %s325 = smul.addr %s324, 128
          %s326 = scalar_lea.hbm %s0, %s325
          %s327 = sshll.u32 %s319, 4
          %s328 = int_to_ptr.vmem [resolvable:$true] %s327
          %333 = dma.hbm_to_vmem [thread:$0]  %s326, 512, %s328, %s316, 128, 128, 8
        $region48: #{tpu_custom_call.1} parent=43 // pred_fallthru
          _
      $region44: #{tpu_custom_call.1} parent=5 // pred_fallthru
        _
      %p334 = scmp.le.s32.totalorder 1, %s21
      %p335 = scmp.lt.s32.totalorder %s21, 3
      %p336 = pnand %p334, %p335
      %p337 = pneg %p336
      // Predicated region
      $region49: #{tpu_custom_call.1} parent=5 // pred_check
        _
      $region50: #{tpu_custom_call.1} parent=5 // pred_check_branch
        %339 = sbr.rel (%p336) target = $region52
      $region51: #{tpu_custom_call.1} parent=5 // pred_region
        %s340 = ssub.s32 %s21, 1
        %s341 = sand.u32 %s48, 1
        %s342 = scalar_lea.sflag [#allocation7], %s341
        %s343 = sand.u32 %s48, 1
        %s344 = smul.addr %s343, 32
        %s345 = scalar_lea.vmem [#allocation6], %s344
        // Predicated region
        $region53: #{tpu_custom_call.1} parent=51 // pred_check
          %p346 = pneg %p61
        $region54: #{tpu_custom_call.1} parent=51 // pred_check_branch
          %348 = sbr.rel (%p346) target = $region56
        $region55: #{tpu_custom_call.1} parent=51 // pred_region
          %349 = dma.done %s342, 512
        $region56: #{tpu_custom_call.1} parent=51 // pred_fallthru
          _
        // Predicated region
        $region57: #{tpu_custom_call.1} parent=51 // pred_check
          %p350 = pneg %p82
        $region58: #{tpu_custom_call.1} parent=51 // pred_check_branch
          %352 = sbr.rel (%p350) target = $region60
        $region59: #{tpu_custom_call.1} parent=51 // pred_region
          %353 = dma.done [#allocation9], 8192
        $region60: #{tpu_custom_call.1} parent=51 // pred_fallthru
          _
        // Predicated region
        $region61: #{tpu_custom_call.1} parent=51 // pred_check
          %p354 = pneg %p103
        $region62: #{tpu_custom_call.1} parent=51 // pred_check_branch
          %356 = sbr.rel (%p354) target = $region64
        $region63: #{tpu_custom_call.1} parent=51 // pred_region
          %357 = dma.done [#allocation9], 8192
        $region64: #{tpu_custom_call.1} parent=51 // pred_fallthru
          _
        // Predicated region
        $region65: #{tpu_custom_call.1} parent=51 // pred_check
          %p358 = pneg %p124
        $region66: #{tpu_custom_call.1} parent=51 // pred_check_branch
          %360 = sbr.rel (%p358) target = $region68
        $region67: #{tpu_custom_call.1} parent=51 // pred_region
          %361 = dma.done [#allocation12], 64
        $region68: #{tpu_custom_call.1} parent=51 // pred_fallthru
          _
        // Predicated region
        $region69: #{tpu_custom_call.1} parent=51 // pred_check
          %p362 = pneg %p145
        $region70: #{tpu_custom_call.1} parent=51 // pred_check_branch
          %364 = sbr.rel (%p362) target = $region72
        $region71: #{tpu_custom_call.1} parent=51 // pred_region
          %365 = dma.done [#allocation12], 16384
        $region72: #{tpu_custom_call.1} parent=51 // pred_fallthru
          _
        %s366 = sand.u32 %s48, 1
        %s367 = scalar_lea.sflag [#allocation7], %s366
        %s368 = sand.u32 %s48, 1
        %s369 = smul.addr %s368, 32
        %s370 = scalar_lea.vmem [#allocation6], %s369
        %p371 = pneg %p61
        %p372 = pneg %p58
        %p373 = pneg %p82
        %p374 = pneg %p79
        %p375 = pneg %p103
        %p376 = pneg %p100
        %p377 = pneg %p124
        %p378 = pneg %p121
        %p379 = pneg %p145
        %p380 = pneg %p142
        %p381 = pneg %p166
        %p382 = pneg %p163
        %p383 = pneg %p187
        %p384 = pneg %p184
        %p385 = pneg %p208
        %p386 = pneg %p205
        %p387 = pneg %p234
        %p388 = pneg %p231
        %p389 = scmp.lt.s32.totalorder %s30, 0
        %s390 = scalar_select %p389, %s30, 0
        %s391 = smul.addr %s390, 8
        %s392 = scalar_lea.vmem %s8, %s391
        %s393 = smul.u32 4, %s31
        %p394 = scmp.lt.s32.totalorder %s30, 0
        %s395 = scalar_select %p394, %s30, 0
        %s396 = smul.addr %s395, 8
        %s397 = scalar_lea.vmem %s8, %s396
        %p398 = scmp.eq.s32.totalorder %s31, 0
        // Predicated region
        $region73: #{tpu_custom_call.1} parent=51 // pred_check
          %p399 = pneg %p398
        $region74: #{tpu_custom_call.1} parent=51 // pred_check_branch
          %401 = sbr.rel (%p399) target = $region76
        $region75: #{tpu_custom_call.1} parent=51 // pred_region
          %402 = vst [vmem:[#allocation3] sm:$0xff] 0.0
          %403 = vst [vmem:[#allocation4] sm:$0xff] 0.0
        $region76: #{tpu_custom_call.1} parent=51 // pred_fallthru
          _
        %v404 = vld [vmem:[%s345] sm:$0xff]
        %v405 = vld [vmem:[%s345 + $0x8] sm:$0xff]
        %v406 = vld [vmem:[%s345 + $0x10] sm:$0xff]
        %v407 = vld [vmem:[%s345 + $0x18] sm:$0xff]
        %v408 = vld [vmem:[#allocation8] sm:$0xff]
        %v409 = vld [vmem:[#allocation8 + $0x8] sm:$0xff]
        %v410 = vld [vmem:[#allocation8 + $0x10] sm:$0xff]
        %v411 = vld [vmem:[#allocation8 + $0x18] sm:$0xff]
        %v412 = vld [vmem:[#allocation8 + $0x20] sm:$0xff]
        %v413 = vld [vmem:[#allocation8 + $0x28] sm:$0xff]
        %v414 = vld [vmem:[#allocation8 + $0x30] sm:$0xff]
        %v415 = vld [vmem:[#allocation8 + $0x38] sm:$0xff]
        %v416 = vld [vmem:[#allocation8 + $0x40] sm:$0xff]
        %v417 = vld [vmem:[#allocation8 + $0x48] sm:$0xff]
        %v418 = vld [vmem:[#allocation8 + $0x50] sm:$0xff]
        %v419 = vld [vmem:[#allocation8 + $0x58] sm:$0xff]
        %v420 = vld [vmem:[#allocation8 + $0x60] sm:$0xff]
        %v421 = vld [vmem:[#allocation8 + $0x68] sm:$0xff]
        %v422 = vld [vmem:[#allocation8 + $0x70] sm:$0xff]
        %v423 = vld [vmem:[#allocation8 + $0x78] sm:$0xff]
        %v424 = vld [vmem:[#allocation8 + $0x80] sm:$0xff]
        %v425 = vld [vmem:[#allocation8 + $0x88] sm:$0xff]
        %v426 = vld [vmem:[#allocation8 + $0x90] sm:$0xff]
        %v427 = vld [vmem:[#allocation8 + $0x98] sm:$0xff]
        %v428 = vld [vmem:[#allocation8 + $0xa0] sm:$0xff]
        %v429 = vld [vmem:[#allocation8 + $0xa8] sm:$0xff]
        %v430 = vld [vmem:[#allocation8 + $0xb0] sm:$0xff]
        %v431 = vld [vmem:[#allocation8 + $0xb8] sm:$0xff]
        %v432 = vld [vmem:[#allocation8 + $0xc0] sm:$0xff]
        %v433 = vld [vmem:[#allocation8 + $0xc8] sm:$0xff]
        %v434 = vld [vmem:[#allocation8 + $0xd0] sm:$0xff]
        %v435 = vld [vmem:[#allocation8 + $0xd8] sm:$0xff]
        %v436 = vld [vmem:[#allocation8 + $0xe0] sm:$0xff]
        %v437 = vld [vmem:[#allocation8 + $0xe8] sm:$0xff]
        %v438 = vld [vmem:[#allocation8 + $0xf0] sm:$0xff]
        %v439 = vld [vmem:[#allocation8 + $0xf8] sm:$0xff]
        %v440 = vld [vmem:[#allocation8 + $0x100] sm:$0xff]
        %v441 = vld [vmem:[#allocation8 + $0x108] sm:$0xff]
        %v442 = vld [vmem:[#allocation8 + $0x110] sm:$0xff]
        %v443 = vld [vmem:[#allocation8 + $0x118] sm:$0xff]
        %v444 = vld [vmem:[#allocation8 + $0x120] sm:$0xff]
        %v445 = vld [vmem:[#allocation8 + $0x128] sm:$0xff]
        %v446 = vld [vmem:[#allocation8 + $0x130] sm:$0xff]
        %v447 = vld [vmem:[#allocation8 + $0x138] sm:$0xff]
        %v448 = vld [vmem:[#allocation8 + $0x140] sm:$0xff]
        %v449 = vld [vmem:[#allocation8 + $0x148] sm:$0xff]
        %v450 = vld [vmem:[#allocation8 + $0x150] sm:$0xff]
        %v451 = vld [vmem:[#allocation8 + $0x158] sm:$0xff]
        %v452 = vld [vmem:[#allocation8 + $0x160] sm:$0xff]
        %v453 = vld [vmem:[#allocation8 + $0x168] sm:$0xff]
        %v454 = vld [vmem:[#allocation8 + $0x170] sm:$0xff]
        %v455 = vld [vmem:[#allocation8 + $0x178] sm:$0xff]
        %v456 = vld [vmem:[#allocation8 + $0x180] sm:$0xff]
        %v457 = vld [vmem:[#allocation8 + $0x188] sm:$0xff]
        %v458 = vld [vmem:[#allocation8 + $0x190] sm:$0xff]
        %v459 = vld [vmem:[#allocation8 + $0x198] sm:$0xff]
        %v460 = vld [vmem:[#allocation8 + $0x1a0] sm:$0xff]
        %v461 = vld [vmem:[#allocation8 + $0x1a8] sm:$0xff]
        %v462 = vld [vmem:[#allocation8 + $0x1b0] sm:$0xff]
        %v463 = vld [vmem:[#allocation8 + $0x1b8] sm:$0xff]
        %v464 = vld [vmem:[#allocation8 + $0x1c0] sm:$0xff]
        %v465 = vld [vmem:[#allocation8 + $0x1c8] sm:$0xff]
        %v466 = vld [vmem:[#allocation8 + $0x1d0] sm:$0xff]
        %v467 = vld [vmem:[#allocation8 + $0x1d8] sm:$0xff]
        %v468 = vld [vmem:[#allocation8 + $0x1e0] sm:$0xff]
        %v469 = vld [vmem:[#allocation8 + $0x1e8] sm:$0xff]
        %v470 = vld [vmem:[#allocation8 + $0x1f0] sm:$0xff]
        %v471 = vld [vmem:[#allocation8 + $0x1f8] sm:$0xff]
        %v472 = vld [vmem:[#allocation11] sm:$0xf]
        %v474 = vlaneseq
        %v475 = vshrl.u32 %v474, 7
        %v476 = vsub.s32 0, %v475
        %v477 = vrot.slane %v472, %v476
        %v478 = vlaneseq
        %v479 = vshrl.u32 %v478, 7
        %v480 = vsub.s32 1, %v479
        %v481 = vrot.slane %v472, %v480
        %v482 = vlaneseq
        %v483 = vshrl.u32 %v482, 7
        %v484 = vsub.s32 2, %v483
        %v485 = vrot.slane %v472, %v484
        %v486 = vlaneseq
        %v487 = vshrl.u32 %v486, 7
        %v488 = vsub.s32 3, %v487
        %v489 = vrot.slane %v472, %v488
        %494 = vmatprep.subr.mxu0 %v409
        %495 = vmatpush1.msra.mxu0 %v408
        %496 = vmatprep.subr.mxu0 %v413
        %497 = vmatpush1.msra.mxu0 %v412
        %498 = vmatprep.subr.mxu0 %v417
        %499 = vmatpush1.msra.mxu0 %v416
        %500 = vmatprep.subr.mxu0 %v421
        %501 = vmatpush1.msra.mxu0 %v420
        %502 = vmatprep.subr.mxu0 %v425
        %503 = vmatpush1.msra.mxu0 %v424
        %504 = vmatprep.subr.mxu0 %v429
        %505 = vmatpush1.msra.mxu0 %v428
        %506 = vmatprep.subr.mxu0 %v433
        %507 = vmatpush1.msra.mxu0 %v432
        %508 = vmatprep.subr.mxu0 %v437
        %509 = vmatpush1.msra.mxu0 %v436
        %510 = vmatprep.subr.mxu0 %v441
        %511 = vmatpush1.msra.mxu0 %v440
        %512 = vmatprep.subr.mxu0 %v445
        %513 = vmatpush1.msra.mxu0 %v444
        %514 = vmatprep.subr.mxu0 %v449
        %515 = vmatpush1.msra.mxu0 %v448
        %516 = vmatprep.subr.mxu0 %v453
        %517 = vmatpush1.msra.mxu0 %v452
        %518 = vmatprep.subr.mxu0 %v457
        %519 = vmatpush1.msra.mxu0 %v456
        %520 = vmatprep.subr.mxu0 %v461
        %521 = vmatpush1.msra.mxu0 %v460
        %522 = vmatprep.subr.mxu0 %v465
        %523 = vmatpush1.msra.mxu0 %v464
        %524 = vmatprep.subr.mxu0 %v469
        %525 = vmatpush1.msra.mxu0 %v468
        %526 = vmatprep.subr.mxu0 0.0
        %527 = vmatpush1.msra.mxu0 0.0
        %528 = vmatprep.subr.mxu0 0.0
        %529 = vmatpush1.msra.mxu0 0.0
        %530 = vmatprep.subr.mxu0 0.0
        %531 = vmatpush1.msra.mxu0 0.0
        %532 = vmatprep.subr.mxu0 0.0
        %533 = vmatpush1.msra.mxu0 0.0
        %534 = vmatprep.subr.mxu0 0.0
        %535 = vmatpush1.msra.mxu0 0.0
        %536 = vmatprep.subr.mxu0 0.0
        %537 = vmatpush1.msra.mxu0 0.0
        %538 = vmatprep.subr.mxu0 0.0
        %539 = vmatpush1.msra.mxu0 0.0
        %540 = vmatprep.subr.mxu0 0.0
        %541 = vmatpush1.msra.mxu0 0.0
        %542 = vmatprep.subr.mxu0 0.0
        %543 = vmatpush1.msra.mxu0 0.0
        %544 = vmatprep.subr.mxu0 0.0
        %545 = vmatpush1.msra.mxu0 0.0
        %546 = vmatprep.subr.mxu0 0.0
        %547 = vmatpush1.msra.mxu0 0.0
        %548 = vmatprep.subr.mxu0 0.0
        %549 = vmatpush1.msra.mxu0 0.0
        %550 = vmatprep.subr.mxu0 0.0
        %551 = vmatpush1.msra.mxu0 0.0
        %552 = vmatprep.subr.mxu0 0.0
        %553 = vmatpush1.msra.mxu0 0.0
        %554 = vmatprep.subr.mxu0 0.0
        %555 = vmatpush1.msra.mxu0 0.0
        %556 = vmatprep.subr.mxu0 0.0
        %557 = vmatpush1.msra.mxu0 0.0
        %558 = vmatprep.mubr.f32.mxu0 0.0
        %559 = vmatmul.mubr.f32.gmra.mrb[0].mxu0 %v404
        %v560 = vpop.f32.mrb[0].mxu0
        %v561 = vadd.f32 %v477, %v560
        %v562 = vpop.f32.mrb[0].mxu0
        %v563 = vadd.f32 %v481, %v562
        %564 = vmatprep.mubr.f32.mxu0 0.0
        %565 = vmatmul.mubr.f32.gmra.mrb[0].mxu0 %v405
        %v566 = vpop.f32.mrb[0].mxu0
        %v567 = vadd.f32 %v477, %v566
        %v568 = vpop.f32.mrb[0].mxu0
        %v569 = vadd.f32 %v481, %v568
        %570 = vmatprep.mubr.f32.mxu0 0.0
        %571 = vmatmul.mubr.f32.gmra.mrb[0].mxu0 %v406
        %v572 = vpop.f32.mrb[0].mxu0
        %v573 = vadd.f32 %v477, %v572
        %v574 = vpop.f32.mrb[0].mxu0
        %v575 = vadd.f32 %v481, %v574
        %576 = vmatprep.mubr.f32.mxu0 0.0
        %577 = vmatmul.mubr.f32.gmra.mrb[0].mxu0 %v407
        %v578 = vpop.f32.mrb[0].mxu0
        %v579 = vadd.f32 %v477, %v578
        %v580 = vpop.f32.mrb[0].mxu0
        %v581 = vadd.f32 %v481, %v580
        %582 = vdwg.mxu0
        %583 = vmatprep.subr.mxu0 %v411
        %584 = vmatpush1.msra.mxu0 %v410
        %585 = vmatprep.subr.mxu0 %v415
        %586 = vmatpush1.msra.mxu0 %v414
        %587 = vmatprep.subr.mxu0 %v419
        %588 = vmatpush1.msra.mxu0 %v418
        %589 = vmatprep.subr.mxu0 %v423
        %590 = vmatpush1.msra.mxu0 %v422
        %591 = vmatprep.subr.mxu0 %v427
        %592 = vmatpush1.msra.mxu0 %v426
        %593 = vmatprep.subr.mxu0 %v431
        %594 = vmatpush1.msra.mxu0 %v430
        %595 = vmatprep.subr.mxu0 %v435
        %596 = vmatpush1.msra.mxu0 %v434
        %597 = vmatprep.subr.mxu0 %v439
        %598 = vmatpush1.msra.mxu0 %v438
        %599 = vmatprep.subr.mxu0 %v443
        %600 = vmatpush1.msra.mxu0 %v442
        %601 = vmatprep.subr.mxu0 %v447
        %602 = vmatpush1.msra.mxu0 %v446
        %603 = vmatprep.subr.mxu0 %v451
        %604 = vmatpush1.msra.mxu0 %v450
        %605 = vmatprep.subr.mxu0 %v455
        %606 = vmatpush1.msra.mxu0 %v454
        %607 = vmatprep.subr.mxu0 %v459
        %608 = vmatpush1.msra.mxu0 %v458
        %609 = vmatprep.subr.mxu0 %v463
        %610 = vmatpush1.msra.mxu0 %v462
        %611 = vmatprep.subr.mxu0 %v467
        %612 = vmatpush1.msra.mxu0 %v466
        %613 = vmatprep.subr.mxu0 %v471
        %614 = vmatpush1.msra.mxu0 %v470
        %615 = vmatprep.subr.mxu0 0.0
        %616 = vmatpush1.msra.mxu0 0.0
        %617 = vmatprep.subr.mxu0 0.0
        %618 = vmatpush1.msra.mxu0 0.0
        %619 = vmatprep.subr.mxu0 0.0
        %620 = vmatpush1.msra.mxu0 0.0
        %621 = vmatprep.subr.mxu0 0.0
        %622 = vmatpush1.msra.mxu0 0.0
        %623 = vmatprep.subr.mxu0 0.0
        %624 = vmatpush1.msra.mxu0 0.0
        %625 = vmatprep.subr.mxu0 0.0
        %626 = vmatpush1.msra.mxu0 0.0
        %627 = vmatprep.subr.mxu0 0.0
        %628 = vmatpush1.msra.mxu0 0.0
        %629 = vmatprep.subr.mxu0 0.0
        %630 = vmatpush1.msra.mxu0 0.0
        %631 = vmatprep.subr.mxu0 0.0
        %632 = vmatpush1.msra.mxu0 0.0
        %633 = vmatprep.subr.mxu0 0.0
        %634 = vmatpush1.msra.mxu0 0.0
        %635 = vmatprep.subr.mxu0 0.0
        %636 = vmatpush1.msra.mxu0 0.0
        %637 = vmatprep.subr.mxu0 0.0
        %638 = vmatpush1.msra.mxu0 0.0
        %639 = vmatprep.subr.mxu0 0.0
        %640 = vmatpush1.msra.mxu0 0.0
        %641 = vmatprep.subr.mxu0 0.0
        %642 = vmatpush1.msra.mxu0 0.0
        %643 = vmatprep.subr.mxu0 0.0
        %644 = vmatpush1.msra.mxu0 0.0
        %645 = vmatprep.subr.mxu0 0.0
        %646 = vmatpush1.msra.mxu0 0.0
        %647 = vmatprep.mubr.f32.mxu0 0.0
        %648 = vmatmul.mubr.f32.gmra.mrb[0].mxu0 %v404
        %v649 = vpop.f32.mrb[0].mxu0
        %v650 = vadd.f32 %v485, %v649
        %v651 = vpop.f32.mrb[0].mxu0
        %v652 = vadd.f32 %v489, %v651
        %653 = vmatprep.mubr.f32.mxu0 0.0
        %654 = vmatmul.mubr.f32.gmra.mrb[0].mxu0 %v405
        %v655 = vpop.f32.mrb[0].mxu0
        %v656 = vadd.f32 %v485, %v655
        %v657 = vpop.f32.mrb[0].mxu0
        %v658 = vadd.f32 %v489, %v657
        %659 = vmatprep.mubr.f32.mxu0 0.0
        %660 = vmatmul.mubr.f32.gmra.mrb[0].mxu0 %v406
        %v661 = vpop.f32.mrb[0].mxu0
        %v662 = vadd.f32 %v485, %v661
        %v663 = vpop.f32.mrb[0].mxu0
        %v664 = vadd.f32 %v489, %v663
        %665 = vmatprep.mubr.f32.mxu0 0.0
        %666 = vmatmul.mubr.f32.gmra.mrb[0].mxu0 %v407
        %v667 = vpop.f32.mrb[0].mxu0
        %v668 = vadd.f32 %v485, %v667
        %v669 = vpop.f32.mrb[0].mxu0
        %v670 = vadd.f32 %v489, %v669
        %671 = vdwg.mxu0
        %672 = vst [vmem:[#allocation2] sm:$0xff] %v561
        %673 = vst [vmem:[#allocation2 + $0x8] sm:$0xff] %v563
        %674 = vst [vmem:[#allocation2 + $0x10] sm:$0xff] %v650
        %675 = vst [vmem:[#allocation2 + $0x18] sm:$0xff] %v652
        %676 = vst [vmem:[#allocation2 + $0x20] sm:$0xff] %v567
        %677 = vst [vmem:[#allocation2 + $0x28] sm:$0xff] %v569
        %678 = vst [vmem:[#allocation2 + $0x30] sm:$0xff] %v656
        %679 = vst [vmem:[#allocation2 + $0x38] sm:$0xff] %v658
        %680 = vst [vmem:[#allocation2 + $0x40] sm:$0xff] %v573
        %681 = vst [vmem:[#allocation2 + $0x48] sm:$0xff] %v575
        %682 = vst [vmem:[#allocation2 + $0x50] sm:$0xff] %v662
        %683 = vst [vmem:[#allocation2 + $0x58] sm:$0xff] %v664
        %684 = vst [vmem:[#allocation2 + $0x60] sm:$0xff] %v579
        %685 = vst [vmem:[#allocation2 + $0x68] sm:$0xff] %v581
        %686 = vst [vmem:[#allocation2 + $0x70] sm:$0xff] %v668
        %687 = vst [vmem:[#allocation2 + $0x78] sm:$0xff] %v670
        %v688 = vld [vmem:[#allocation10] sm:$0xff]
        %v689 = vld [vmem:[#allocation10 + $0x8] sm:$0xff]
        %v690 = vld [vmem:[#allocation10 + $0x10] sm:$0xff]
        %v691 = vld [vmem:[#allocation10 + $0x18] sm:$0xff]
        %v692 = vld [vmem:[#allocation10 + $0x20] sm:$0xff]
        %v693 = vld [vmem:[#allocation10 + $0x28] sm:$0xff]
        %v694 = vld [vmem:[#allocation10 + $0x30] sm:$0xff]
        %v695 = vld [vmem:[#allocation10 + $0x38] sm:$0xff]
        %v696 = vld [vmem:[#allocation10 + $0x40] sm:$0xff]
        %v697 = vld [vmem:[#allocation10 + $0x48] sm:$0xff]
        %v698 = vld [vmem:[#allocation10 + $0x50] sm:$0xff]
        %v699 = vld [vmem:[#allocation10 + $0x58] sm:$0xff]
        %v700 = vld [vmem:[#allocation10 + $0x60] sm:$0xff]
        %v701 = vld [vmem:[#allocation10 + $0x68] sm:$0xff]
        %v702 = vld [vmem:[#allocation10 + $0x70] sm:$0xff]
        %v703 = vld [vmem:[#allocation10 + $0x78] sm:$0xff]
        %v704 = vld [vmem:[#allocation10 + $0x80] sm:$0xff]
        %v705 = vld [vmem:[#allocation10 + $0x88] sm:$0xff]
        %v706 = vld [vmem:[#allocation10 + $0x90] sm:$0xff]
        %v707 = vld [vmem:[#allocation10 + $0x98] sm:$0xff]
        %v708 = vld [vmem:[#allocation10 + $0xa0] sm:$0xff]
        %v709 = vld [vmem:[#allocation10 + $0xa8] sm:$0xff]
        %v710 = vld [vmem:[#allocation10 + $0xb0] sm:$0xff]
        %v711 = vld [vmem:[#allocation10 + $0xb8] sm:$0xff]
        %v712 = vld [vmem:[#allocation10 + $0xc0] sm:$0xff]
        %v713 = vld [vmem:[#allocation10 + $0xc8] sm:$0xff]
        %v714 = vld [vmem:[#allocation10 + $0xd0] sm:$0xff]
        %v715 = vld [vmem:[#allocation10 + $0xd8] sm:$0xff]
        %v716 = vld [vmem:[#allocation10 + $0xe0] sm:$0xff]
        %v717 = vld [vmem:[#allocation10 + $0xe8] sm:$0xff]
        %v718 = vld [vmem:[#allocation10 + $0xf0] sm:$0xff]
        %v719 = vld [vmem:[#allocation10 + $0xf8] sm:$0xff]
        %v720 = vld [vmem:[#allocation10 + $0x100] sm:$0xff]
        %v721 = vld [vmem:[#allocation10 + $0x108] sm:$0xff]
        %v722 = vld [vmem:[#allocation10 + $0x110] sm:$0xff]
        %v723 = vld [vmem:[#allocation10 + $0x118] sm:$0xff]
        %v724 = vld [vmem:[#allocation10 + $0x120] sm:$0xff]
        %v725 = vld [vmem:[#allocation10 + $0x128] sm:$0xff]
        %v726 = vld [vmem:[#allocation10 + $0x130] sm:$0xff]
        %v727 = vld [vmem:[#allocation10 + $0x138] sm:$0xff]
        %v728 = vld [vmem:[#allocation10 + $0x140] sm:$0xff]
        %v729 = vld [vmem:[#allocation10 + $0x148] sm:$0xff]
        %v730 = vld [vmem:[#allocation10 + $0x150] sm:$0xff]
        %v731 = vld [vmem:[#allocation10 + $0x158] sm:$0xff]
        %v732 = vld [vmem:[#allocation10 + $0x160] sm:$0xff]
        %v733 = vld [vmem:[#allocation10 + $0x168] sm:$0xff]
        %v734 = vld [vmem:[#allocation10 + $0x170] sm:$0xff]
        %v735 = vld [vmem:[#allocation10 + $0x178] sm:$0xff]
        %v736 = vld [vmem:[#allocation10 + $0x180] sm:$0xff]
        %v737 = vld [vmem:[#allocation10 + $0x188] sm:$0xff]
        %v738 = vld [vmem:[#allocation10 + $0x190] sm:$0xff]
        %v739 = vld [vmem:[#allocation10 + $0x198] sm:$0xff]
        %v740 = vld [vmem:[#allocation10 + $0x1a0] sm:$0xff]
        %v741 = vld [vmem:[#allocation10 + $0x1a8] sm:$0xff]
        %v742 = vld [vmem:[#allocation10 + $0x1b0] sm:$0xff]
        %v743 = vld [vmem:[#allocation10 + $0x1b8] sm:$0xff]
        %v744 = vld [vmem:[#allocation10 + $0x1c0] sm:$0xff]
        %v745 = vld [vmem:[#allocation10 + $0x1c8] sm:$0xff]
        %v746 = vld [vmem:[#allocation10 + $0x1d0] sm:$0xff]
        %v747 = vld [vmem:[#allocation10 + $0x1d8] sm:$0xff]
        %v748 = vld [vmem:[#allocation10 + $0x1e0] sm:$0xff]
        %v749 = vld [vmem:[#allocation10 + $0x1e8] sm:$0xff]
        %v750 = vld [vmem:[#allocation10 + $0x1f0] sm:$0xff]
        %v751 = vld [vmem:[#allocation10 + $0x1f8] sm:$0xff]
        %v752 = vld [vmem:[#allocation3] sm:$0xff]
        %v753 = vld [vmem:[#allocation4] sm:$0xff]
        %s754 = smul.u32 0, 4
        %s755 = smul.addr %s754, 8
        %s756 = scalar_lea.vmem [#allocation2], %s755
        %v757 = vld [vmem:[%s756] sm:$0xff]
        %v758 = vld [vmem:[%s756 + $0x8] sm:$0xff]
        %v759 = vld [vmem:[%s756 + $0x10] sm:$0xff]
        %v760 = vld [vmem:[%s756 + $0x18] sm:$0xff]
        %761 = vmatprep.subr.mxu0 %v689
        %762 = vmatpush1.msra.mxu0 %v688
        %763 = vmatprep.subr.mxu0 %v693
        %764 = vmatpush1.msra.mxu0 %v692
        %765 = vmatprep.subr.mxu0 %v697
        %766 = vmatpush1.msra.mxu0 %v696
        %767 = vmatprep.subr.mxu0 %v701
        %768 = vmatpush1.msra.mxu0 %v700
        %769 = vmatprep.subr.mxu0 %v705
        %770 = vmatpush1.msra.mxu0 %v704
        %771 = vmatprep.subr.mxu0 %v709
        %772 = vmatpush1.msra.mxu0 %v708
        %773 = vmatprep.subr.mxu0 %v713
        %774 = vmatpush1.msra.mxu0 %v712
        %775 = vmatprep.subr.mxu0 %v717
        %776 = vmatpush1.msra.mxu0 %v716
        %777 = vmatprep.subr.mxu0 %v721
        %778 = vmatpush1.msra.mxu0 %v720
        %779 = vmatprep.subr.mxu0 %v725
        %780 = vmatpush1.msra.mxu0 %v724
        %781 = vmatprep.subr.mxu0 %v729
        %782 = vmatpush1.msra.mxu0 %v728
        %783 = vmatprep.subr.mxu0 %v733
        %784 = vmatpush1.msra.mxu0 %v732
        %785 = vmatprep.subr.mxu0 %v737
        %786 = vmatpush1.msra.mxu0 %v736
        %787 = vmatprep.subr.mxu0 %v741
        %788 = vmatpush1.msra.mxu0 %v740
        %789 = vmatprep.subr.mxu0 %v745
        %790 = vmatpush1.msra.mxu0 %v744
        %791 = vmatprep.subr.mxu0 %v749
        %792 = vmatpush1.msra.mxu0 %v748
        %793 = vmatprep.subr.mxu0 0.0
        %794 = vmatpush1.msra.mxu0 0.0
        %795 = vmatprep.subr.mxu0 0.0
        %796 = vmatpush1.msra.mxu0 0.0
        %797 = vmatprep.subr.mxu0 0.0
        %798 = vmatpush1.msra.mxu0 0.0
        %799 = vmatprep.subr.mxu0 0.0
        %800 = vmatpush1.msra.mxu0 0.0
        %801 = vmatprep.subr.mxu0 0.0
        %802 = vmatpush1.msra.mxu0 0.0
        %803 = vmatprep.subr.mxu0 0.0
        %804 = vmatpush1.msra.mxu0 0.0
        %805 = vmatprep.subr.mxu0 0.0
        %806 = vmatpush1.msra.mxu0 0.0
        %807 = vmatprep.subr.mxu0 0.0
        %808 = vmatpush1.msra.mxu0 0.0
        %809 = vmatprep.subr.mxu0 0.0
        %810 = vmatpush1.msra.mxu0 0.0
        %811 = vmatprep.subr.mxu0 0.0
        %812 = vmatpush1.msra.mxu0 0.0
        %813 = vmatprep.subr.mxu0 0.0
        %814 = vmatpush1.msra.mxu0 0.0
        %815 = vmatprep.subr.mxu0 0.0
        %816 = vmatpush1.msra.mxu0 0.0
        %817 = vmatprep.subr.mxu0 0.0
        %818 = vmatpush1.msra.mxu0 0.0
        %819 = vmatprep.subr.mxu0 0.0
        %820 = vmatpush1.msra.mxu0 0.0
        %821 = vmatprep.subr.mxu0 0.0
        %822 = vmatpush1.msra.mxu0 0.0
        %823 = vmatprep.subr.mxu0 0.0
        %824 = vmatpush1.msra.mxu0 0.0
        %825 = vmatprep.mubr.f32.mxu0 0.0
        %826 = vmatmul.mubr.f32.gmra.mrb[0].mxu0 %v753
        %v827 = vpop.f32.mrb[0].mxu0
        %v828 = vadd.f32 0.0, %v827
        %v829 = vpop.f32.mrb[0].mxu0
        %v830 = vadd.f32 0.0, %v829
        %831 = vdwg.mxu0
        %832 = vmatprep.subr.mxu0 %v691
        %833 = vmatpush1.msra.mxu0 %v690
        %834 = vmatprep.subr.mxu0 %v695
        %835 = vmatpush1.msra.mxu0 %v694
        %836 = vmatprep.subr.mxu0 %v699
        %837 = vmatpush1.msra.mxu0 %v698
        %838 = vmatprep.subr.mxu0 %v703
        %839 = vmatpush1.msra.mxu0 %v702
        %840 = vmatprep.subr.mxu0 %v707
        %841 = vmatpush1.msra.mxu0 %v706
        %842 = vmatprep.subr.mxu0 %v711
        %843 = vmatpush1.msra.mxu0 %v710
        %844 = vmatprep.subr.mxu0 %v715
        %845 = vmatpush1.msra.mxu0 %v714
        %846 = vmatprep.subr.mxu0 %v719
        %847 = vmatpush1.msra.mxu0 %v718
        %848 = vmatprep.subr.mxu0 %v723
        %849 = vmatpush1.msra.mxu0 %v722
        %850 = vmatprep.subr.mxu0 %v727
        %851 = vmatpush1.msra.mxu0 %v726
        %852 = vmatprep.subr.mxu0 %v731
        %853 = vmatpush1.msra.mxu0 %v730
        %854 = vmatprep.subr.mxu0 %v735
        %855 = vmatpush1.msra.mxu0 %v734
        %856 = vmatprep.subr.mxu0 %v739
        %857 = vmatpush1.msra.mxu0 %v738
        %858 = vmatprep.subr.mxu0 %v743
        %859 = vmatpush1.msra.mxu0 %v742
        %860 = vmatprep.subr.mxu0 %v747
        %861 = vmatpush1.msra.mxu0 %v746
        %862 = vmatprep.subr.mxu0 %v751
        %863 = vmatpush1.msra.mxu0 %v750
        %864 = vmatprep.subr.mxu0 0.0
        %865 = vmatpush1.msra.mxu0 0.0
        %866 = vmatprep.subr.mxu0 0.0
        %867 = vmatpush1.msra.mxu0 0.0
        %868 = vmatprep.subr.mxu0 0.0
        %869 = vmatpush1.msra.mxu0 0.0
        %870 = vmatprep.subr.mxu0 0.0
        %871 = vmatpush1.msra.mxu0 0.0
        %872 = vmatprep.subr.mxu0 0.0
        %873 = vmatpush1.msra.mxu0 0.0
        %874 = vmatprep.subr.mxu0 0.0
        %875 = vmatpush1.msra.mxu0 0.0
        %876 = vmatprep.subr.mxu0 0.0
        %877 = vmatpush1.msra.mxu0 0.0
        %878 = vmatprep.subr.mxu0 0.0
        %879 = vmatpush1.msra.mxu0 0.0
        %880 = vmatprep.subr.mxu0 0.0
        %881 = vmatpush1.msra.mxu0 0.0
        %882 = vmatprep.subr.mxu0 0.0
        %883 = vmatpush1.msra.mxu0 0.0
        %884 = vmatprep.subr.mxu0 0.0
        %885 = vmatpush1.msra.mxu0 0.0
        %886 = vmatprep.subr.mxu0 0.0
        %887 = vmatpush1.msra.mxu0 0.0
        %888 = vmatprep.subr.mxu0 0.0
        %889 = vmatpush1.msra.mxu0 0.0
        %890 = vmatprep.subr.mxu0 0.0
        %891 = vmatpush1.msra.mxu0 0.0
        %892 = vmatprep.subr.mxu0 0.0
        %893 = vmatpush1.msra.mxu0 0.0
        %894 = vmatprep.subr.mxu0 0.0
        %895 = vmatpush1.msra.mxu0 0.0
        %896 = vmatprep.mubr.f32.mxu0 0.0
        %897 = vmatmul.mubr.f32.gmra.mrb[0].mxu0 %v753
        %v898 = vpop.f32.mrb[0].mxu0
        %v899 = vadd.f32 0.0, %v898
        %v900 = vpop.f32.mrb[0].mxu0
        %v901 = vadd.f32 0.0, %v900
        %902 = vdwg.mxu0
        %v903 = vadd.f32 %v757, %v828
        %v904 = vadd.f32 %v758, %v830
        %v905 = vadd.f32 %v759, %v899
        %v906 = vadd.f32 %v760, %v901
        %v907 = vxor.u32 %v903, 2147483648
        %v908 = vmul.f32 %v907, 1.442695
        %v909 = vpow.pop %v908
        %v910 = vadd.f32 %v909, 1.0
        %v911 = vrcp.pop %v910
        %v912 = vmul.f32 1.0, %v911
        %v913 = vxor.u32 %v904, 2147483648
        %v914 = vmul.f32 %v913, 1.442695
        %v915 = vpow.pop %v914
        %v916 = vadd.f32 %v915, 1.0
        %v917 = vrcp.pop %v916
        %v918 = vmul.f32 1.0, %v917
        %v919 = vtanh.pop %v905
        %v920 = vxor.u32 %v906, 2147483648
        %v921 = vmul.f32 %v920, 1.442695
        %v922 = vpow.pop %v921
        %v923 = vadd.f32 %v922, 1.0
        %v924 = vrcp.pop %v923
        %v925 = vmul.f32 1.0, %v924
        %v926 = vmul.f32 %v918, %v752
        %v927 = vmul.f32 %v912, %v919
        %v928 = vadd.f32 %v926, %v927
        %v929 = vtanh.pop %v928
        %v930 = vmul.f32 %v925, %v929
        %s931 = smul.u32 1, 4
        %s932 = smul.addr %s931, 8
        %s933 = scalar_lea.vmem [#allocation2], %s932
        %v934 = vld [vmem:[%s933] sm:$0xff]
        %v935 = vld [vmem:[%s933 + $0x8] sm:$0xff]
        %v936 = vld [vmem:[%s933 + $0x10] sm:$0xff]
        %v937 = vld [vmem:[%s933 + $0x18] sm:$0xff]
        %938 = vmatprep.subr.mxu0 %v689
        %939 = vmatpush1.msra.mxu0 %v688
        %940 = vmatprep.subr.mxu0 %v693
        %941 = vmatpush1.msra.mxu0 %v692
        %942 = vmatprep.subr.mxu0 %v697
        %943 = vmatpush1.msra.mxu0 %v696
        %944 = vmatprep.subr.mxu0 %v701
        %945 = vmatpush1.msra.mxu0 %v700
        %946 = vmatprep.subr.mxu0 %v705
        %947 = vmatpush1.msra.mxu0 %v704
        %948 = vmatprep.subr.mxu0 %v709
        %949 = vmatpush1.msra.mxu0 %v708
        %950 = vmatprep.subr.mxu0 %v713
        %951 = vmatpush1.msra.mxu0 %v712
        %952 = vmatprep.subr.mxu0 %v717
        %953 = vmatpush1.msra.mxu0 %v716
        %954 = vmatprep.subr.mxu0 %v721
        %955 = vmatpush1.msra.mxu0 %v720
        %956 = vmatprep.subr.mxu0 %v725
        %957 = vmatpush1.msra.mxu0 %v724
        %958 = vmatprep.subr.mxu0 %v729
        %959 = vmatpush1.msra.mxu0 %v728
        %960 = vmatprep.subr.mxu0 %v733
        %961 = vmatpush1.msra.mxu0 %v732
        %962 = vmatprep.subr.mxu0 %v737
        %963 = vmatpush1.msra.mxu0 %v736
        %964 = vmatprep.subr.mxu0 %v741
        %965 = vmatpush1.msra.mxu0 %v740
        %966 = vmatprep.subr.mxu0 %v745
        %967 = vmatpush1.msra.mxu0 %v744
        %968 = vmatprep.subr.mxu0 %v749
        %969 = vmatpush1.msra.mxu0 %v748
        %970 = vmatprep.subr.mxu0 0.0
        %971 = vmatpush1.msra.mxu0 0.0
        %972 = vmatprep.subr.mxu0 0.0
        %973 = vmatpush1.msra.mxu0 0.0
        %974 = vmatprep.subr.mxu0 0.0
        %975 = vmatpush1.msra.mxu0 0.0
        %976 = vmatprep.subr.mxu0 0.0
        %977 = vmatpush1.msra.mxu0 0.0
        %978 = vmatprep.subr.mxu0 0.0
        %979 = vmatpush1.msra.mxu0 0.0
        %980 = vmatprep.subr.mxu0 0.0
        %981 = vmatpush1.msra.mxu0 0.0
        %982 = vmatprep.subr.mxu0 0.0
        %983 = vmatpush1.msra.mxu0 0.0
        %984 = vmatprep.subr.mxu0 0.0
        %985 = vmatpush1.msra.mxu0 0.0
        %986 = vmatprep.subr.mxu0 0.0
        %987 = vmatpush1.msra.mxu0 0.0
        %988 = vmatprep.subr.mxu0 0.0
        %989 = vmatpush1.msra.mxu0 0.0
        %990 = vmatprep.subr.mxu0 0.0
        %991 = vmatpush1.msra.mxu0 0.0
        %992 = vmatprep.subr.mxu0 0.0
        %993 = vmatpush1.msra.mxu0 0.0
        %994 = vmatprep.subr.mxu0 0.0
        %995 = vmatpush1.msra.mxu0 0.0
        %996 = vmatprep.subr.mxu0 0.0
        %997 = vmatpush1.msra.mxu0 0.0
        %998 = vmatprep.subr.mxu0 0.0
        %999 = vmatpush1.msra.mxu0 0.0
        %1000 = vmatprep.subr.mxu0 0.0
        %1001 = vmatpush1.msra.mxu0 0.0
        %1002 = vmatprep.mubr.f32.mxu0 0.0
        %1003 = vmatmul.mubr.f32.gmra.mrb[0].mxu0 %v930
        %v1004 = vpop.f32.mrb[0].mxu0
        %v1005 = vadd.f32 0.0, %v1004
        %v1006 = vpop.f32.mrb[0].mxu0
        %v1007 = vadd.f32 0.0, %v1006
        %1008 = vdwg.mxu0
        %1009 = vmatprep.subr.mxu0 %v691
        %1010 = vmatpush1.msra.mxu0 %v690
        %1011 = vmatprep.subr.mxu0 %v695
        %1012 = vmatpush1.msra.mxu0 %v694
        %1013 = vmatprep.subr.mxu0 %v699
        %1014 = vmatpush1.msra.mxu0 %v698
        %1015 = vmatprep.subr.mxu0 %v703
        %1016 = vmatpush1.msra.mxu0 %v702
        %1017 = vmatprep.subr.mxu0 %v707
        %1018 = vmatpush1.msra.mxu0 %v706
        %1019 = vmatprep.subr.mxu0 %v711
        %1020 = vmatpush1.msra.mxu0 %v710
        %1021 = vmatprep.subr.mxu0 %v715
        %1022 = vmatpush1.msra.mxu0 %v714
        %1023 = vmatprep.subr.mxu0 %v719
        %1024 = vmatpush1.msra.mxu0 %v718
        %1025 = vmatprep.subr.mxu0 %v723
        %1026 = vmatpush1.msra.mxu0 %v722
        %1027 = vmatprep.subr.mxu0 %v727
        %1028 = vmatpush1.msra.mxu0 %v726
        %1029 = vmatprep.subr.mxu0 %v731
        %1030 = vmatpush1.msra.mxu0 %v730
        %1031 = vmatprep.subr.mxu0 %v735
        %1032 = vmatpush1.msra.mxu0 %v734
        %1033 = vmatprep.subr.mxu0 %v739
        %1034 = vmatpush1.msra.mxu0 %v738
        %1035 = vmatprep.subr.mxu0 %v743
        %1036 = vmatpush1.msra.mxu0 %v742
        %1037 = vmatprep.subr.mxu0 %v747
        %1038 = vmatpush1.msra.mxu0 %v746
        %1039 = vmatprep.subr.mxu0 %v751
        %1040 = vmatpush1.msra.mxu0 %v750
        %1041 = vmatprep.subr.mxu0 0.0
        %1042 = vmatpush1.msra.mxu0 0.0
        %1043 = vmatprep.subr.mxu0 0.0
        %1044 = vmatpush1.msra.mxu0 0.0
        %1045 = vmatprep.subr.mxu0 0.0
        %1046 = vmatpush1.msra.mxu0 0.0
        %1047 = vmatprep.subr.mxu0 0.0
        %1048 = vmatpush1.msra.mxu0 0.0
        %1049 = vmatprep.subr.mxu0 0.0
        %1050 = vmatpush1.msra.mxu0 0.0
        %1051 = vmatprep.subr.mxu0 0.0
        %1052 = vmatpush1.msra.mxu0 0.0
        %1053 = vmatprep.subr.mxu0 0.0
        %1054 = vmatpush1.msra.mxu0 0.0
        %1055 = vmatprep.subr.mxu0 0.0
        %1056 = vmatpush1.msra.mxu0 0.0
        %1057 = vmatprep.subr.mxu0 0.0
        %1058 = vmatpush1.msra.mxu0 0.0
        %1059 = vmatprep.subr.mxu0 0.0
        %1060 = vmatpush1.msra.mxu0 0.0
        %1061 = vmatprep.subr.mxu0 0.0
        %1062 = vmatpush1.msra.mxu0 0.0
        %1063 = vmatprep.subr.mxu0 0.0
        %1064 = vmatpush1.msra.mxu0 0.0
        %1065 = vmatprep.subr.mxu0 0.0
        %1066 = vmatpush1.msra.mxu0 0.0
        %1067 = vmatprep.subr.mxu0 0.0
        %1068 = vmatpush1.msra.mxu0 0.0
        %1069 = vmatprep.subr.mxu0 0.0
        %1070 = vmatpush1.msra.mxu0 0.0
        %1071 = vmatprep.subr.mxu0 0.0
        %1072 = vmatpush1.msra.mxu0 0.0
        %1073 = vmatprep.mubr.f32.mxu0 0.0
        %1074 = vmatmul.mubr.f32.gmra.mrb[0].mxu0 %v930
        %v1075 = vpop.f32.mrb[0].mxu0
        %v1076 = vadd.f32 0.0, %v1075
        %v1077 = vpop.f32.mrb[0].mxu0
        %v1078 = vadd.f32 0.0, %v1077
        %1079 = vdwg.mxu0
        %v1080 = vadd.f32 %v934, %v1005
        %v1081 = vadd.f32 %v935, %v1007
        %v1082 = vadd.f32 %v936, %v1076
        %v1083 = vadd.f32 %v937, %v1078
        %v1084 = vxor.u32 %v1080, 2147483648
        %v1085 = vmul.f32 %v1084, 1.442695
        %v1086 = vpow.pop %v1085
        %v1087 = vadd.f32 %v1086, 1.0
        %v1088 = vrcp.pop %v1087
        %v1089 = vmul.f32 1.0, %v1088
        %v1090 = vxor.u32 %v1081, 2147483648
        %v1091 = vmul.f32 %v1090, 1.442695
        %v1092 = vpow.pop %v1091
        %v1093 = vadd.f32 %v1092, 1.0
        %v1094 = vrcp.pop %v1093
        %v1095 = vmul.f32 1.0, %v1094
        %v1096 = vtanh.pop %v1082
        %v1097 = vxor.u32 %v1083, 2147483648
        %v1098 = vmul.f32 %v1097, 1.442695
        %v1099 = vpow.pop %v1098
        %v1100 = vadd.f32 %v1099, 1.0
        %v1101 = vrcp.pop %v1100
        %v1102 = vmul.f32 1.0, %v1101
        %v1103 = vmul.f32 %v1095, %v928
        %v1104 = vmul.f32 %v1089, %v1096
        %v1105 = vadd.f32 %v1103, %v1104
        %v1106 = vtanh.pop %v1105
        %v1107 = vmul.f32 %v1102, %v1106
        %s1108 = smul.u32 2, 4
        %s1109 = smul.addr %s1108, 8
        %s1110 = scalar_lea.vmem [#allocation2], %s1109
        %v1111 = vld [vmem:[%s1110] sm:$0xff]
        %v1112 = vld [vmem:[%s1110 + $0x8] sm:$0xff]
        %v1113 = vld [vmem:[%s1110 + $0x10] sm:$0xff]
        %v1114 = vld [vmem:[%s1110 + $0x18] sm:$0xff]
        %1115 = vmatprep.subr.mxu0 %v689
        %1116 = vmatpush1.msra.mxu0 %v688
        %1117 = vmatprep.subr.mxu0 %v693
        %1118 = vmatpush1.msra.mxu0 %v692
        %1119 = vmatprep.subr.mxu0 %v697
        %1120 = vmatpush1.msra.mxu0 %v696
        %1121 = vmatprep.subr.mxu0 %v701
        %1122 = vmatpush1.msra.mxu0 %v700
        %1123 = vmatprep.subr.mxu0 %v705
        %1124 = vmatpush1.msra.mxu0 %v704
        %1125 = vmatprep.subr.mxu0 %v709
        %1126 = vmatpush1.msra.mxu0 %v708
        %1127 = vmatprep.subr.mxu0 %v713
        %1128 = vmatpush1.msra.mxu0 %v712
        %1129 = vmatprep.subr.mxu0 %v717
        %1130 = vmatpush1.msra.mxu0 %v716
        %1131 = vmatprep.subr.mxu0 %v721
        %1132 = vmatpush1.msra.mxu0 %v720
        %1133 = vmatprep.subr.mxu0 %v725
        %1134 = vmatpush1.msra.mxu0 %v724
        %1135 = vmatprep.subr.mxu0 %v729
        %1136 = vmatpush1.msra.mxu0 %v728
        %1137 = vmatprep.subr.mxu0 %v733
        %1138 = vmatpush1.msra.mxu0 %v732
        %1139 = vmatprep.subr.mxu0 %v737
        %1140 = vmatpush1.msra.mxu0 %v736
        %1141 = vmatprep.subr.mxu0 %v741
        %1142 = vmatpush1.msra.mxu0 %v740
        %1143 = vmatprep.subr.mxu0 %v745
        %1144 = vmatpush1.msra.mxu0 %v744
        %1145 = vmatprep.subr.mxu0 %v749
        %1146 = vmatpush1.msra.mxu0 %v748
        %1147 = vmatprep.subr.mxu0 0.0
        %1148 = vmatpush1.msra.mxu0 0.0
        %1149 = vmatprep.subr.mxu0 0.0
        %1150 = vmatpush1.msra.mxu0 0.0
        %1151 = vmatprep.subr.mxu0 0.0
        %1152 = vmatpush1.msra.mxu0 0.0
        %1153 = vmatprep.subr.mxu0 0.0
        %1154 = vmatpush1.msra.mxu0 0.0
        %1155 = vmatprep.subr.mxu0 0.0
        %1156 = vmatpush1.msra.mxu0 0.0
        %1157 = vmatprep.subr.mxu0 0.0
        %1158 = vmatpush1.msra.mxu0 0.0
        %1159 = vmatprep.subr.mxu0 0.0
        %1160 = vmatpush1.msra.mxu0 0.0
        %1161 = vmatprep.subr.mxu0 0.0
        %1162 = vmatpush1.msra.mxu0 0.0
        %1163 = vmatprep.subr.mxu0 0.0
        %1164 = vmatpush1.msra.mxu0 0.0
        %1165 = vmatprep.subr.mxu0 0.0
        %1166 = vmatpush1.msra.mxu0 0.0
        %1167 = vmatprep.subr.mxu0 0.0
        %1168 = vmatpush1.msra.mxu0 0.0
        %1169 = vmatprep.subr.mxu0 0.0
        %1170 = vmatpush1.msra.mxu0 0.0
        %1171 = vmatprep.subr.mxu0 0.0
        %1172 = vmatpush1.msra.mxu0 0.0
        %1173 = vmatprep.subr.mxu0 0.0
        %1174 = vmatpush1.msra.mxu0 0.0
        %1175 = vmatprep.subr.mxu0 0.0
        %1176 = vmatpush1.msra.mxu0 0.0
        %1177 = vmatprep.subr.mxu0 0.0
        %1178 = vmatpush1.msra.mxu0 0.0
        %1179 = vmatprep.mubr.f32.mxu0 0.0
        %1180 = vmatmul.mubr.f32.gmra.mrb[0].mxu0 %v1107
        %v1181 = vpop.f32.mrb[0].mxu0
        %v1182 = vadd.f32 0.0, %v1181
        %v1183 = vpop.f32.mrb[0].mxu0
        %v1184 = vadd.f32 0.0, %v1183
        %1185 = vdwg.mxu0
        %1186 = vmatprep.subr.mxu0 %v691
        %1187 = vmatpush1.msra.mxu0 %v690
        %1188 = vmatprep.subr.mxu0 %v695
        %1189 = vmatpush1.msra.mxu0 %v694
        %1190 = vmatprep.subr.mxu0 %v699
        %1191 = vmatpush1.msra.mxu0 %v698
        %1192 = vmatprep.subr.mxu0 %v703
        %1193 = vmatpush1.msra.mxu0 %v702
        %1194 = vmatprep.subr.mxu0 %v707
        %1195 = vmatpush1.msra.mxu0 %v706
        %1196 = vmatprep.subr.mxu0 %v711
        %1197 = vmatpush1.msra.mxu0 %v710
        %1198 = vmatprep.subr.mxu0 %v715
        %1199 = vmatpush1.msra.mxu0 %v714
        %1200 = vmatprep.subr.mxu0 %v719
        %1201 = vmatpush1.msra.mxu0 %v718
        %1202 = vmatprep.subr.mxu0 %v723
        %1203 = vmatpush1.msra.mxu0 %v722
        %1204 = vmatprep.subr.mxu0 %v727
        %1205 = vmatpush1.msra.mxu0 %v726
        %1206 = vmatprep.subr.mxu0 %v731
        %1207 = vmatpush1.msra.mxu0 %v730
        %1208 = vmatprep.subr.mxu0 %v735
        %1209 = vmatpush1.msra.mxu0 %v734
        %1210 = vmatprep.subr.mxu0 %v739
        %1211 = vmatpush1.msra.mxu0 %v738
        %1212 = vmatprep.subr.mxu0 %v743
        %1213 = vmatpush1.msra.mxu0 %v742
        %1214 = vmatprep.subr.mxu0 %v747
        %1215 = vmatpush1.msra.mxu0 %v746
        %1216 = vmatprep.subr.mxu0 %v751
        %1217 = vmatpush1.msra.mxu0 %v750
        %1218 = vmatprep.subr.mxu0 0.0
        %1219 = vmatpush1.msra.mxu0 0.0
        %1220 = vmatprep.subr.mxu0 0.0
        %1221 = vmatpush1.msra.mxu0 0.0
        %1222 = vmatprep.subr.mxu0 0.0
        %1223 = vmatpush1.msra.mxu0 0.0
        %1224 = vmatprep.subr.mxu0 0.0
        %1225 = vmatpush1.msra.mxu0 0.0
        %1226 = vmatprep.subr.mxu0 0.0
        %1227 = vmatpush1.msra.mxu0 0.0
        %1228 = vmatprep.subr.mxu0 0.0
        %1229 = vmatpush1.msra.mxu0 0.0
        %1230 = vmatprep.subr.mxu0 0.0
        %1231 = vmatpush1.msra.mxu0 0.0
        %1232 = vmatprep.subr.mxu0 0.0
        %1233 = vmatpush1.msra.mxu0 0.0
        %1234 = vmatprep.subr.mxu0 0.0
        %1235 = vmatpush1.msra.mxu0 0.0
        %1236 = vmatprep.subr.mxu0 0.0
        %1237 = vmatpush1.msra.mxu0 0.0
        %1238 = vmatprep.subr.mxu0 0.0
        %1239 = vmatpush1.msra.mxu0 0.0
        %1240 = vmatprep.subr.mxu0 0.0
        %1241 = vmatpush1.msra.mxu0 0.0
        %1242 = vmatprep.subr.mxu0 0.0
        %1243 = vmatpush1.msra.mxu0 0.0
        %1244 = vmatprep.subr.mxu0 0.0
        %1245 = vmatpush1.msra.mxu0 0.0
        %1246 = vmatprep.subr.mxu0 0.0
        %1247 = vmatpush1.msra.mxu0 0.0
        %1248 = vmatprep.subr.mxu0 0.0
        %1249 = vmatpush1.msra.mxu0 0.0
        %1250 = vmatprep.mubr.f32.mxu0 0.0
        %1251 = vmatmul.mubr.f32.gmra.mrb[0].mxu0 %v1107
        %v1252 = vpop.f32.mrb[0].mxu0
        %v1253 = vadd.f32 0.0, %v1252
        %v1254 = vpop.f32.mrb[0].mxu0
        %v1255 = vadd.f32 0.0, %v1254
        %1256 = vdwg.mxu0
        %v1257 = vadd.f32 %v1111, %v1182
        %v1258 = vadd.f32 %v1112, %v1184
        %v1259 = vadd.f32 %v1113, %v1253
        %v1260 = vadd.f32 %v1114, %v1255
        %v1261 = vxor.u32 %v1257, 2147483648
        %v1262 = vmul.f32 %v1261, 1.442695
        %v1263 = vpow.pop %v1262
        %v1264 = vadd.f32 %v1263, 1.0
        %v1265 = vrcp.pop %v1264
        %v1266 = vmul.f32 1.0, %v1265
        %v1267 = vxor.u32 %v1258, 2147483648
        %v1268 = vmul.f32 %v1267, 1.442695
        %v1269 = vpow.pop %v1268
        %v1270 = vadd.f32 %v1269, 1.0
        %v1271 = vrcp.pop %v1270
        %v1272 = vmul.f32 1.0, %v1271
        %v1273 = vtanh.pop %v1259
        %v1274 = vxor.u32 %v1260, 2147483648
        %v1275 = vmul.f32 %v1274, 1.442695
        %v1276 = vpow.pop %v1275
        %v1277 = vadd.f32 %v1276, 1.0
        %v1278 = vrcp.pop %v1277
        %v1279 = vmul.f32 1.0, %v1278
        %v1280 = vmul.f32 %v1272, %v1105
        %v1281 = vmul.f32 %v1266, %v1273
        %v1282 = vadd.f32 %v1280, %v1281
        %v1283 = vtanh.pop %v1282
        %v1284 = vmul.f32 %v1279, %v1283
        %s1285 = smul.u32 3, 4
        %s1286 = smul.addr %s1285, 8
        %s1287 = scalar_lea.vmem [#allocation2], %s1286
        %v1288 = vld [vmem:[%s1287] sm:$0xff]
        %v1289 = vld [vmem:[%s1287 + $0x8] sm:$0xff]
        %v1290 = vld [vmem:[%s1287 + $0x10] sm:$0xff]
        %v1291 = vld [vmem:[%s1287 + $0x18] sm:$0xff]
        %1292 = vmatprep.subr.mxu0 %v689
        %1293 = vmatpush1.msra.mxu0 %v688
        %1294 = vmatprep.subr.mxu0 %v693
        %1295 = vmatpush1.msra.mxu0 %v692
        %1296 = vmatprep.subr.mxu0 %v697
        %1297 = vmatpush1.msra.mxu0 %v696
        %1298 = vmatprep.subr.mxu0 %v701
        %1299 = vmatpush1.msra.mxu0 %v700
        %1300 = vmatprep.subr.mxu0 %v705
        %1301 = vmatpush1.msra.mxu0 %v704
        %1302 = vmatprep.subr.mxu0 %v709
        %1303 = vmatpush1.msra.mxu0 %v708
        %1304 = vmatprep.subr.mxu0 %v713
        %1305 = vmatpush1.msra.mxu0 %v712
        %1306 = vmatprep.subr.mxu0 %v717
        %1307 = vmatpush1.msra.mxu0 %v716
        %1308 = vmatprep.subr.mxu0 %v721
        %1309 = vmatpush1.msra.mxu0 %v720
        %1310 = vmatprep.subr.mxu0 %v725
        %1311 = vmatpush1.msra.mxu0 %v724
        %1312 = vmatprep.subr.mxu0 %v729
        %1313 = vmatpush1.msra.mxu0 %v728
        %1314 = vmatprep.subr.mxu0 %v733
        %1315 = vmatpush1.msra.mxu0 %v732
        %1316 = vmatprep.subr.mxu0 %v737
        %1317 = vmatpush1.msra.mxu0 %v736
        %1318 = vmatprep.subr.mxu0 %v741
        %1319 = vmatpush1.msra.mxu0 %v740
        %1320 = vmatprep.subr.mxu0 %v745
        %1321 = vmatpush1.msra.mxu0 %v744
        %1322 = vmatprep.subr.mxu0 %v749
        %1323 = vmatpush1.msra.mxu0 %v748
        %1324 = vmatprep.subr.mxu0 0.0
        %1325 = vmatpush1.msra.mxu0 0.0
        %1326 = vmatprep.subr.mxu0 0.0
        %1327 = vmatpush1.msra.mxu0 0.0
        %1328 = vmatprep.subr.mxu0 0.0
        %1329 = vmatpush1.msra.mxu0 0.0
        %1330 = vmatprep.subr.mxu0 0.0
        %1331 = vmatpush1.msra.mxu0 0.0
        %1332 = vmatprep.subr.mxu0 0.0
        %1333 = vmatpush1.msra.mxu0 0.0
        %1334 = vmatprep.subr.mxu0 0.0
        %1335 = vmatpush1.msra.mxu0 0.0
        %1336 = vmatprep.subr.mxu0 0.0
        %1337 = vmatpush1.msra.mxu0 0.0
        %1338 = vmatprep.subr.mxu0 0.0
        %1339 = vmatpush1.msra.mxu0 0.0
        %1340 = vmatprep.subr.mxu0 0.0
        %1341 = vmatpush1.msra.mxu0 0.0
        %1342 = vmatprep.subr.mxu0 0.0
        %1343 = vmatpush1.msra.mxu0 0.0
        %1344 = vmatprep.subr.mxu0 0.0
        %1345 = vmatpush1.msra.mxu0 0.0
        %1346 = vmatprep.subr.mxu0 0.0
        %1347 = vmatpush1.msra.mxu0 0.0
        %1348 = vmatprep.subr.mxu0 0.0
        %1349 = vmatpush1.msra.mxu0 0.0
        %1350 = vmatprep.subr.mxu0 0.0
        %1351 = vmatpush1.msra.mxu0 0.0
        %1352 = vmatprep.subr.mxu0 0.0
        %1353 = vmatpush1.msra.mxu0 0.0
        %1354 = vmatprep.subr.mxu0 0.0
        %1355 = vmatpush1.msra.mxu0 0.0
        %1356 = vmatprep.mubr.f32.mxu0 0.0
        %1357 = vmatmul.mubr.f32.gmra.mrb[0].mxu0 %v1284
        %v1358 = vpop.f32.mrb[0].mxu0
        %v1359 = vadd.f32 0.0, %v1358
        %v1360 = vpop.f32.mrb[0].mxu0
        %v1361 = vadd.f32 0.0, %v1360
        %1362 = vdwg.mxu0
        %1363 = vmatprep.subr.mxu0 %v691
        %1364 = vmatpush1.msra.mxu0 %v690
        %1365 = vmatprep.subr.mxu0 %v695
        %1366 = vmatpush1.msra.mxu0 %v694
        %1367 = vmatprep.subr.mxu0 %v699
        %1368 = vmatpush1.msra.mxu0 %v698
        %1369 = vmatprep.subr.mxu0 %v703
        %1370 = vmatpush1.msra.mxu0 %v702
        %1371 = vmatprep.subr.mxu0 %v707
        %1372 = vmatpush1.msra.mxu0 %v706
        %1373 = vmatprep.subr.mxu0 %v711
        %1374 = vmatpush1.msra.mxu0 %v710
        %1375 = vmatprep.subr.mxu0 %v715
        %1376 = vmatpush1.msra.mxu0 %v714
        %1377 = vmatprep.subr.mxu0 %v719
        %1378 = vmatpush1.msra.mxu0 %v718
        %1379 = vmatprep.subr.mxu0 %v723
        %1380 = vmatpush1.msra.mxu0 %v722
        %1381 = vmatprep.subr.mxu0 %v727
        %1382 = vmatpush1.msra.mxu0 %v726
        %1383 = vmatprep.subr.mxu0 %v731
        %1384 = vmatpush1.msra.mxu0 %v730
        %1385 = vmatprep.subr.mxu0 %v735
        %1386 = vmatpush1.msra.mxu0 %v734
        %1387 = vmatprep.subr.mxu0 %v739
        %1388 = vmatpush1.msra.mxu0 %v738
        %1389 = vmatprep.subr.mxu0 %v743
        %1390 = vmatpush1.msra.mxu0 %v742
        %1391 = vmatprep.subr.mxu0 %v747
        %1392 = vmatpush1.msra.mxu0 %v746
        %1393 = vmatprep.subr.mxu0 %v751
        %1394 = vmatpush1.msra.mxu0 %v750
        %1395 = vmatprep.subr.mxu0 0.0
        %1396 = vmatpush1.msra.mxu0 0.0
        %1397 = vmatprep.subr.mxu0 0.0
        %1398 = vmatpush1.msra.mxu0 0.0
        %1399 = vmatprep.subr.mxu0 0.0
        %1400 = vmatpush1.msra.mxu0 0.0
        %1401 = vmatprep.subr.mxu0 0.0
        %1402 = vmatpush1.msra.mxu0 0.0
        %1403 = vmatprep.subr.mxu0 0.0
        %1404 = vmatpush1.msra.mxu0 0.0
        %1405 = vmatprep.subr.mxu0 0.0
        %1406 = vmatpush1.msra.mxu0 0.0
        %1407 = vmatprep.subr.mxu0 0.0
        %1408 = vmatpush1.msra.mxu0 0.0
        %1409 = vmatprep.subr.mxu0 0.0
        %1410 = vmatpush1.msra.mxu0 0.0
        %1411 = vmatprep.subr.mxu0 0.0
        %1412 = vmatpush1.msra.mxu0 0.0
        %1413 = vmatprep.subr.mxu0 0.0
        %1414 = vmatpush1.msra.mxu0 0.0
        %1415 = vmatprep.subr.mxu0 0.0
        %1416 = vmatpush1.msra.mxu0 0.0
        %1417 = vmatprep.subr.mxu0 0.0
        %1418 = vmatpush1.msra.mxu0 0.0
        %1419 = vmatprep.subr.mxu0 0.0
        %1420 = vmatpush1.msra.mxu0 0.0
        %1421 = vmatprep.subr.mxu0 0.0
        %1422 = vmatpush1.msra.mxu0 0.0
        %1423 = vmatprep.subr.mxu0 0.0
        %1424 = vmatpush1.msra.mxu0 0.0
        %1425 = vmatprep.subr.mxu0 0.0
        %1426 = vmatpush1.msra.mxu0 0.0
        %1427 = vmatprep.mubr.f32.mxu0 0.0
        %1428 = vmatmul.mubr.f32.gmra.mrb[0].mxu0 %v1284
        %v1429 = vpop.f32.mrb[0].mxu0
        %v1430 = vadd.f32 0.0, %v1429
        %v1431 = vpop.f32.mrb[0].mxu0
        %v1432 = vadd.f32 0.0, %v1431
        %1433 = vdwg.mxu0
        %v1434 = vadd.f32 %v1288, %v1359
        %v1435 = vadd.f32 %v1289, %v1361
        %v1436 = vadd.f32 %v1290, %v1430
        %v1437 = vadd.f32 %v1291, %v1432
        %v1438 = vxor.u32 %v1434, 2147483648
        %v1439 = vmul.f32 %v1438, 1.442695
        %v1440 = vpow.pop %v1439
        %v1441 = vadd.f32 %v1440, 1.0
        %v1442 = vrcp.pop %v1441
        %v1443 = vmul.f32 1.0, %v1442
        %v1444 = vxor.u32 %v1435, 2147483648
        %v1445 = vmul.f32 %v1444, 1.442695
        %v1446 = vpow.pop %v1445
        %v1447 = vadd.f32 %v1446, 1.0
        %v1448 = vrcp.pop %v1447
        %v1449 = vmul.f32 1.0, %v1448
        %v1450 = vtanh.pop %v1436
        %v1451 = vxor.u32 %v1437, 2147483648
        %v1452 = vmul.f32 %v1451, 1.442695
        %v1453 = vpow.pop %v1452
        %v1454 = vadd.f32 %v1453, 1.0
        %v1455 = vrcp.pop %v1454
        %v1456 = vmul.f32 1.0, %v1455
        %v1457 = vmul.f32 %v1449, %v1282
        %v1458 = vmul.f32 %v1443, %v1450
        %v1459 = vadd.f32 %v1457, %v1458
        %v1460 = vtanh.pop %v1459
        %v1461 = vmul.f32 %v1456, %v1460
        %1462 = vst [vmem:[#allocation3] sm:$0xff] %v1459
        %1463 = vst [vmem:[#allocation4] sm:$0xff] %v1461
        %p1464 = scmp.eq.s32.totalorder %s31, 1
        // Predicated region
        $region77: #{tpu_custom_call.1} parent=51 // pred_check
          %p1465 = pneg %p1464
        $region78: #{tpu_custom_call.1} parent=51 // pred_check_branch
          %1467 = sbr.rel (%p1465) target = $region80
        $region79: #{tpu_custom_call.1} parent=51 // pred_region
          %v1468 = vld [vmem:[#allocation13] sm:$0xff]
          %v1469 = vld [vmem:[#allocation13 + $0x8] sm:$0xff]
          %v1470 = vld [vmem:[#allocation13 + $0x10] sm:$0xff]
          %v1471 = vld [vmem:[#allocation13 + $0x18] sm:$0xff]
          %v1472 = vld [vmem:[#allocation13 + $0x20] sm:$0xff]
          %v1473 = vld [vmem:[#allocation13 + $0x28] sm:$0xff]
          %v1474 = vld [vmem:[#allocation13 + $0x30] sm:$0xff]
          %v1475 = vld [vmem:[#allocation13 + $0x38] sm:$0xff]
          %v1476 = vld [vmem:[#allocation13 + $0x40] sm:$0xff]
          %v1477 = vld [vmem:[#allocation13 + $0x48] sm:$0xff]
          %v1478 = vld [vmem:[#allocation13 + $0x50] sm:$0xff]
          %v1479 = vld [vmem:[#allocation13 + $0x58] sm:$0xff]
          %v1480 = vld [vmem:[#allocation13 + $0x60] sm:$0xff]
          %v1481 = vld [vmem:[#allocation13 + $0x68] sm:$0xff]
          %v1482 = vld [vmem:[#allocation13 + $0x70] sm:$0xff]
          %v1483 = vld [vmem:[#allocation13 + $0x78] sm:$0xff]
          %v1484 = vld [vmem:[#allocation13 + $0x80] sm:$0xff]
          %v1485 = vld [vmem:[#allocation13 + $0x88] sm:$0xff]
          %v1486 = vld [vmem:[#allocation13 + $0x90] sm:$0xff]
          %v1487 = vld [vmem:[#allocation13 + $0x98] sm:$0xff]
          %v1488 = vld [vmem:[#allocation13 + $0xa0] sm:$0xff]
          %v1489 = vld [vmem:[#allocation13 + $0xa8] sm:$0xff]
          %v1490 = vld [vmem:[#allocation13 + $0xb0] sm:$0xff]
          %v1491 = vld [vmem:[#allocation13 + $0xb8] sm:$0xff]
          %v1492 = vld [vmem:[#allocation13 + $0xc0] sm:$0xff]
          %v1493 = vld [vmem:[#allocation13 + $0xc8] sm:$0xff]
          %v1494 = vld [vmem:[#allocation13 + $0xd0] sm:$0xff]
          %v1495 = vld [vmem:[#allocation13 + $0xd8] sm:$0xff]
          %v1496 = vld [vmem:[#allocation13 + $0xe0] sm:$0xff]
          %v1497 = vld [vmem:[#allocation13 + $0xe8] sm:$0xff]
          %v1498 = vld [vmem:[#allocation13 + $0xf0] sm:$0xff]
          %v1499 = vld [vmem:[#allocation13 + $0xf8] sm:$0xff]
          %v1500 = vld [vmem:[#allocation13 + $0x100] sm:$0xff]
          %v1501 = vld [vmem:[#allocation13 + $0x108] sm:$0xff]
          %v1502 = vld [vmem:[#allocation13 + $0x110] sm:$0xff]
          %v1503 = vld [vmem:[#allocation13 + $0x118] sm:$0xff]
          %v1504 = vld [vmem:[#allocation13 + $0x120] sm:$0xff]
          %v1505 = vld [vmem:[#allocation13 + $0x128] sm:$0xff]
          %v1506 = vld [vmem:[#allocation13 + $0x130] sm:$0xff]
          %v1507 = vld [vmem:[#allocation13 + $0x138] sm:$0xff]
          %v1508 = vld [vmem:[#allocation13 + $0x140] sm:$0xff]
          %v1509 = vld [vmem:[#allocation13 + $0x148] sm:$0xff]
          %v1510 = vld [vmem:[#allocation13 + $0x150] sm:$0xff]
          %v1511 = vld [vmem:[#allocation13 + $0x158] sm:$0xff]
          %v1512 = vld [vmem:[#allocation13 + $0x160] sm:$0xff]
          %v1513 = vld [vmem:[#allocation13 + $0x168] sm:$0xff]
          %v1514 = vld [vmem:[#allocation13 + $0x170] sm:$0xff]
          %v1515 = vld [vmem:[#allocation13 + $0x178] sm:$0xff]
          %v1516 = vld [vmem:[#allocation13 + $0x180] sm:$0xff]
          %v1517 = vld [vmem:[#allocation13 + $0x188] sm:$0xff]
          %v1518 = vld [vmem:[#allocation13 + $0x190] sm:$0xff]
          %v1519 = vld [vmem:[#allocation13 + $0x198] sm:$0xff]
          %v1520 = vld [vmem:[#allocation13 + $0x1a0] sm:$0xff]
          %v1521 = vld [vmem:[#allocation13 + $0x1a8] sm:$0xff]
          %v1522 = vld [vmem:[#allocation13 + $0x1b0] sm:$0xff]
          %v1523 = vld [vmem:[#allocation13 + $0x1b8] sm:$0xff]
          %v1524 = vld [vmem:[#allocation13 + $0x1c0] sm:$0xff]
          %v1525 = vld [vmem:[#allocation13 + $0x1c8] sm:$0xff]
          %v1526 = vld [vmem:[#allocation13 + $0x1d0] sm:$0xff]
          %v1527 = vld [vmem:[#allocation13 + $0x1d8] sm:$0xff]
          %v1528 = vld [vmem:[#allocation13 + $0x1e0] sm:$0xff]
          %v1529 = vld [vmem:[#allocation13 + $0x1e8] sm:$0xff]
          %v1530 = vld [vmem:[#allocation13 + $0x1f0] sm:$0xff]
          %v1531 = vld [vmem:[#allocation13 + $0x1f8] sm:$0xff]
          %v1532 = vld [vmem:[#allocation13 + $0x200] sm:$0xff]
          %v1533 = vld [vmem:[#allocation13 + $0x208] sm:$0xff]
          %v1534 = vld [vmem:[#allocation13 + $0x210] sm:$0xff]
          %v1535 = vld [vmem:[#allocation13 + $0x218] sm:$0xff]
          %v1536 = vld [vmem:[#allocation13 + $0x220] sm:$0xff]
          %v1537 = vld [vmem:[#allocation13 + $0x228] sm:$0xff]
          %v1538 = vld [vmem:[#allocation13 + $0x230] sm:$0xff]
          %v1539 = vld [vmem:[#allocation13 + $0x238] sm:$0xff]
          %v1540 = vld [vmem:[#allocation13 + $0x240] sm:$0xff]
          %v1541 = vld [vmem:[#allocation13 + $0x248] sm:$0xff]
          %v1542 = vld [vmem:[#allocation13 + $0x250] sm:$0xff]
          %v1543 = vld [vmem:[#allocation13 + $0x258] sm:$0xff]
          %v1544 = vld [vmem:[#allocation13 + $0x260] sm:$0xff]
          %v1545 = vld [vmem:[#allocation13 + $0x268] sm:$0xff]
          %v1546 = vld [vmem:[#allocation13 + $0x270] sm:$0xff]
          %v1547 = vld [vmem:[#allocation13 + $0x278] sm:$0xff]
          %v1548 = vld [vmem:[#allocation13 + $0x280] sm:$0xff]
          %v1549 = vld [vmem:[#allocation13 + $0x288] sm:$0xff]
          %v1550 = vld [vmem:[#allocation13 + $0x290] sm:$0xff]
          %v1551 = vld [vmem:[#allocation13 + $0x298] sm:$0xff]
          %v1552 = vld [vmem:[#allocation13 + $0x2a0] sm:$0xff]
          %v1553 = vld [vmem:[#allocation13 + $0x2a8] sm:$0xff]
          %v1554 = vld [vmem:[#allocation13 + $0x2b0] sm:$0xff]
          %v1555 = vld [vmem:[#allocation13 + $0x2b8] sm:$0xff]
          %v1556 = vld [vmem:[#allocation13 + $0x2c0] sm:$0xff]
          %v1557 = vld [vmem:[#allocation13 + $0x2c8] sm:$0xff]
          %v1558 = vld [vmem:[#allocation13 + $0x2d0] sm:$0xff]
          %v1559 = vld [vmem:[#allocation13 + $0x2d8] sm:$0xff]
          %v1560 = vld [vmem:[#allocation13 + $0x2e0] sm:$0xff]
          %v1561 = vld [vmem:[#allocation13 + $0x2e8] sm:$0xff]
          %v1562 = vld [vmem:[#allocation13 + $0x2f0] sm:$0xff]
          %v1563 = vld [vmem:[#allocation13 + $0x2f8] sm:$0xff]
          %v1564 = vld [vmem:[#allocation13 + $0x300] sm:$0xff]
          %v1565 = vld [vmem:[#allocation13 + $0x308] sm:$0xff]
          %v1566 = vld [vmem:[#allocation13 + $0x310] sm:$0xff]
          %v1567 = vld [vmem:[#allocation13 + $0x318] sm:$0xff]
          %v1568 = vld [vmem:[#allocation13 + $0x320] sm:$0xff]
          %v1569 = vld [vmem:[#allocation13 + $0x328] sm:$0xff]
          %v1570 = vld [vmem:[#allocation13 + $0x330] sm:$0xff]
          %v1571 = vld [vmem:[#allocation13 + $0x338] sm:$0xff]
          %v1572 = vld [vmem:[#allocation13 + $0x340] sm:$0xff]
          %v1573 = vld [vmem:[#allocation13 + $0x348] sm:$0xff]
          %v1574 = vld [vmem:[#allocation13 + $0x350] sm:$0xff]
          %v1575 = vld [vmem:[#allocation13 + $0x358] sm:$0xff]
          %v1576 = vld [vmem:[#allocation13 + $0x360] sm:$0xff]
          %v1577 = vld [vmem:[#allocation13 + $0x368] sm:$0xff]
          %v1578 = vld [vmem:[#allocation13 + $0x370] sm:$0xff]
          %v1579 = vld [vmem:[#allocation13 + $0x378] sm:$0xff]
          %v1580 = vld [vmem:[#allocation13 + $0x380] sm:$0xff]
          %v1581 = vld [vmem:[#allocation13 + $0x388] sm:$0xff]
          %v1582 = vld [vmem:[#allocation13 + $0x390] sm:$0xff]
          %v1583 = vld [vmem:[#allocation13 + $0x398] sm:$0xff]
          %v1584 = vld [vmem:[#allocation13 + $0x3a0] sm:$0xff]
          %v1585 = vld [vmem:[#allocation13 + $0x3a8] sm:$0xff]
          %v1586 = vld [vmem:[#allocation13 + $0x3b0] sm:$0xff]
          %v1587 = vld [vmem:[#allocation13 + $0x3b8] sm:$0xff]
          %v1588 = vld [vmem:[#allocation13 + $0x3c0] sm:$0xff]
          %v1589 = vld [vmem:[#allocation13 + $0x3c8] sm:$0xff]
          %v1590 = vld [vmem:[#allocation13 + $0x3d0] sm:$0xff]
          %v1591 = vld [vmem:[#allocation13 + $0x3d8] sm:$0xff]
          %v1592 = vld [vmem:[#allocation13 + $0x3e0] sm:$0xff]
          %v1593 = vld [vmem:[#allocation13 + $0x3e8] sm:$0xff]
          %v1594 = vld [vmem:[#allocation13 + $0x3f0] sm:$0xff]
          %v1595 = vld [vmem:[#allocation13 + $0x3f8] sm:$0xff]
          %v1596 = vld [vmem:[%s5] sm:$0xff]
          %v1598 = vlaneseq
          %v1599 = vshrl.u32 %v1598, 7
          %v1600 = vsub.s32 0, %v1599
          %v1601 = vrot.slane %v1596, %v1600
          %v1602 = vlaneseq
          %v1603 = vshrl.u32 %v1602, 7
          %v1604 = vsub.s32 1, %v1603
          %v1605 = vrot.slane %v1596, %v1604
          %v1606 = vlaneseq
          %v1607 = vshrl.u32 %v1606, 7
          %v1608 = vsub.s32 2, %v1607
          %v1609 = vrot.slane %v1596, %v1608
          %v1610 = vlaneseq
          %v1611 = vshrl.u32 %v1610, 7
          %v1612 = vsub.s32 3, %v1611
          %v1613 = vrot.slane %v1596, %v1612
          %v1614 = vlaneseq
          %v1615 = vshrl.u32 %v1614, 7
          %v1616 = vsub.s32 4, %v1615
          %v1617 = vrot.slane %v1596, %v1616
          %v1618 = vlaneseq
          %v1619 = vshrl.u32 %v1618, 7
          %v1620 = vsub.s32 5, %v1619
          %v1621 = vrot.slane %v1596, %v1620
          %v1622 = vlaneseq
          %v1623 = vshrl.u32 %v1622, 7
          %v1624 = vsub.s32 6, %v1623
          %v1625 = vrot.slane %v1596, %v1624
          %v1626 = vlaneseq
          %v1627 = vshrl.u32 %v1626, 7
          %v1628 = vsub.s32 7, %v1627
          %v1629 = vrot.slane %v1596, %v1628
          %1638 = vmatprep.subr.mxu0 %v1469
          %1639 = vmatpush1.msra.mxu0 %v1468
          %1640 = vmatprep.subr.mxu0 %v1477
          %1641 = vmatpush1.msra.mxu0 %v1476
          %1642 = vmatprep.subr.mxu0 %v1485
          %1643 = vmatpush1.msra.mxu0 %v1484
          %1644 = vmatprep.subr.mxu0 %v1493
          %1645 = vmatpush1.msra.mxu0 %v1492
          %1646 = vmatprep.subr.mxu0 %v1501
          %1647 = vmatpush1.msra.mxu0 %v1500
          %1648 = vmatprep.subr.mxu0 %v1509
          %1649 = vmatpush1.msra.mxu0 %v1508
          %1650 = vmatprep.subr.mxu0 %v1517
          %1651 = vmatpush1.msra.mxu0 %v1516
          %1652 = vmatprep.subr.mxu0 %v1525
          %1653 = vmatpush1.msra.mxu0 %v1524
          %1654 = vmatprep.subr.mxu0 %v1533
          %1655 = vmatpush1.msra.mxu0 %v1532
          %1656 = vmatprep.subr.mxu0 %v1541
          %1657 = vmatpush1.msra.mxu0 %v1540
          %1658 = vmatprep.subr.mxu0 %v1549
          %1659 = vmatpush1.msra.mxu0 %v1548
          %1660 = vmatprep.subr.mxu0 %v1557
          %1661 = vmatpush1.msra.mxu0 %v1556
          %1662 = vmatprep.subr.mxu0 %v1565
          %1663 = vmatpush1.msra.mxu0 %v1564
          %1664 = vmatprep.subr.mxu0 %v1573
          %1665 = vmatpush1.msra.mxu0 %v1572
          %1666 = vmatprep.subr.mxu0 %v1581
          %1667 = vmatpush1.msra.mxu0 %v1580
          %1668 = vmatprep.subr.mxu0 %v1589
          %1669 = vmatpush1.msra.mxu0 %v1588
          %1670 = vmatprep.subr.mxu0 0.0
          %1671 = vmatpush1.msra.mxu0 0.0
          %1672 = vmatprep.subr.mxu0 0.0
          %1673 = vmatpush1.msra.mxu0 0.0
          %1674 = vmatprep.subr.mxu0 0.0
          %1675 = vmatpush1.msra.mxu0 0.0
          %1676 = vmatprep.subr.mxu0 0.0
          %1677 = vmatpush1.msra.mxu0 0.0
          %1678 = vmatprep.subr.mxu0 0.0
          %1679 = vmatpush1.msra.mxu0 0.0
          %1680 = vmatprep.subr.mxu0 0.0
          %1681 = vmatpush1.msra.mxu0 0.0
          %1682 = vmatprep.subr.mxu0 0.0
          %1683 = vmatpush1.msra.mxu0 0.0
          %1684 = vmatprep.subr.mxu0 0.0
          %1685 = vmatpush1.msra.mxu0 0.0
          %1686 = vmatprep.subr.mxu0 0.0
          %1687 = vmatpush1.msra.mxu0 0.0
          %1688 = vmatprep.subr.mxu0 0.0
          %1689 = vmatpush1.msra.mxu0 0.0
          %1690 = vmatprep.subr.mxu0 0.0
          %1691 = vmatpush1.msra.mxu0 0.0
          %1692 = vmatprep.subr.mxu0 0.0
          %1693 = vmatpush1.msra.mxu0 0.0
          %1694 = vmatprep.subr.mxu0 0.0
          %1695 = vmatpush1.msra.mxu0 0.0
          %1696 = vmatprep.subr.mxu0 0.0
          %1697 = vmatpush1.msra.mxu0 0.0
          %1698 = vmatprep.subr.mxu0 0.0
          %1699 = vmatpush1.msra.mxu0 0.0
          %1700 = vmatprep.subr.mxu0 0.0
          %1701 = vmatpush1.msra.mxu0 0.0
          %1702 = vmatprep.mubr.f32.mxu0 0.0
          %1703 = vmatmul.mubr.f32.gmra.mrb[0].mxu0 %v1459
          %v1704 = vpop.f32.mrb[0].mxu0
          %v1705 = vadd.f32 %v1601, %v1704
          %v1706 = vpop.f32.mrb[0].mxu0
          %v1707 = vadd.f32 %v1605, %v1706
          %1708 = vdwg.mxu0
          %1709 = vmatprep.subr.mxu0 %v1471
          %1710 = vmatpush1.msra.mxu0 %v1470
          %1711 = vmatprep.subr.mxu0 %v1479
          %1712 = vmatpush1.msra.mxu0 %v1478
          %1713 = vmatprep.subr.mxu0 %v1487
          %1714 = vmatpush1.msra.mxu0 %v1486
          %1715 = vmatprep.subr.mxu0 %v1495
          %1716 = vmatpush1.msra.mxu0 %v1494
          %1717 = vmatprep.subr.mxu0 %v1503
          %1718 = vmatpush1.msra.mxu0 %v1502
          %1719 = vmatprep.subr.mxu0 %v1511
          %1720 = vmatpush1.msra.mxu0 %v1510
          %1721 = vmatprep.subr.mxu0 %v1519
          %1722 = vmatpush1.msra.mxu0 %v1518
          %1723 = vmatprep.subr.mxu0 %v1527
          %1724 = vmatpush1.msra.mxu0 %v1526
          %1725 = vmatprep.subr.mxu0 %v1535
          %1726 = vmatpush1.msra.mxu0 %v1534
          %1727 = vmatprep.subr.mxu0 %v1543
          %1728 = vmatpush1.msra.mxu0 %v1542
          %1729 = vmatprep.subr.mxu0 %v1551
          %1730 = vmatpush1.msra.mxu0 %v1550
          %1731 = vmatprep.subr.mxu0 %v1559
          %1732 = vmatpush1.msra.mxu0 %v1558
          %1733 = vmatprep.subr.mxu0 %v1567
          %1734 = vmatpush1.msra.mxu0 %v1566
          %1735 = vmatprep.subr.mxu0 %v1575
          %1736 = vmatpush1.msra.mxu0 %v1574
          %1737 = vmatprep.subr.mxu0 %v1583
          %1738 = vmatpush1.msra.mxu0 %v1582
          %1739 = vmatprep.subr.mxu0 %v1591
          %1740 = vmatpush1.msra.mxu0 %v1590
          %1741 = vmatprep.subr.mxu0 0.0
          %1742 = vmatpush1.msra.mxu0 0.0
          %1743 = vmatprep.subr.mxu0 0.0
          %1744 = vmatpush1.msra.mxu0 0.0
          %1745 = vmatprep.subr.mxu0 0.0
          %1746 = vmatpush1.msra.mxu0 0.0
          %1747 = vmatprep.subr.mxu0 0.0
          %1748 = vmatpush1.msra.mxu0 0.0
          %1749 = vmatprep.subr.mxu0 0.0
          %1750 = vmatpush1.msra.mxu0 0.0
          %1751 = vmatprep.subr.mxu0 0.0
          %1752 = vmatpush1.msra.mxu0 0.0
          %1753 = vmatprep.subr.mxu0 0.0
          %1754 = vmatpush1.msra.mxu0 0.0
          %1755 = vmatprep.subr.mxu0 0.0
          %1756 = vmatpush1.msra.mxu0 0.0
          %1757 = vmatprep.subr.mxu0 0.0
          %1758 = vmatpush1.msra.mxu0 0.0
          %1759 = vmatprep.subr.mxu0 0.0
          %1760 = vmatpush1.msra.mxu0 0.0
          %1761 = vmatprep.subr.mxu0 0.0
          %1762 = vmatpush1.msra.mxu0 0.0
          %1763 = vmatprep.subr.mxu0 0.0
          %1764 = vmatpush1.msra.mxu0 0.0
          %1765 = vmatprep.subr.mxu0 0.0
          %1766 = vmatpush1.msra.mxu0 0.0
          %1767 = vmatprep.subr.mxu0 0.0
          %1768 = vmatpush1.msra.mxu0 0.0
          %1769 = vmatprep.subr.mxu0 0.0
          %1770 = vmatpush1.msra.mxu0 0.0
          %1771 = vmatprep.subr.mxu0 0.0
          %1772 = vmatpush1.msra.mxu0 0.0
          %1773 = vmatprep.mubr.f32.mxu0 0.0
          %1774 = vmatmul.mubr.f32.gmra.mrb[0].mxu0 %v1459
          %v1775 = vpop.f32.mrb[0].mxu0
          %v1776 = vadd.f32 %v1609, %v1775
          %v1777 = vpop.f32.mrb[0].mxu0
          %v1778 = vadd.f32 %v1613, %v1777
          %1779 = vdwg.mxu0
          %1780 = vmatprep.subr.mxu0 %v1473
          %1781 = vmatpush1.msra.mxu0 %v1472
          %1782 = vmatprep.subr.mxu0 %v1481
          %1783 = vmatpush1.msra.mxu0 %v1480
          %1784 = vmatprep.subr.mxu0 %v1489
          %1785 = vmatpush1.msra.mxu0 %v1488
          %1786 = vmatprep.subr.mxu0 %v1497
          %1787 = vmatpush1.msra.mxu0 %v1496
          %1788 = vmatprep.subr.mxu0 %v1505
          %1789 = vmatpush1.msra.mxu0 %v1504
          %1790 = vmatprep.subr.mxu0 %v1513
          %1791 = vmatpush1.msra.mxu0 %v1512
          %1792 = vmatprep.subr.mxu0 %v1521
          %1793 = vmatpush1.msra.mxu0 %v1520
          %1794 = vmatprep.subr.mxu0 %v1529
          %1795 = vmatpush1.msra.mxu0 %v1528
          %1796 = vmatprep.subr.mxu0 %v1537
          %1797 = vmatpush1.msra.mxu0 %v1536
          %1798 = vmatprep.subr.mxu0 %v1545
          %1799 = vmatpush1.msra.mxu0 %v1544
          %1800 = vmatprep.subr.mxu0 %v1553
          %1801 = vmatpush1.msra.mxu0 %v1552
          %1802 = vmatprep.subr.mxu0 %v1561
          %1803 = vmatpush1.msra.mxu0 %v1560
          %1804 = vmatprep.subr.mxu0 %v1569
          %1805 = vmatpush1.msra.mxu0 %v1568
          %1806 = vmatprep.subr.mxu0 %v1577
          %1807 = vmatpush1.msra.mxu0 %v1576
          %1808 = vmatprep.subr.mxu0 %v1585
          %1809 = vmatpush1.msra.mxu0 %v1584
          %1810 = vmatprep.subr.mxu0 %v1593
          %1811 = vmatpush1.msra.mxu0 %v1592
          %1812 = vmatprep.subr.mxu0 0.0
          %1813 = vmatpush1.msra.mxu0 0.0
          %1814 = vmatprep.subr.mxu0 0.0
          %1815 = vmatpush1.msra.mxu0 0.0
          %1816 = vmatprep.subr.mxu0 0.0
          %1817 = vmatpush1.msra.mxu0 0.0
          %1818 = vmatprep.subr.mxu0 0.0
          %1819 = vmatpush1.msra.mxu0 0.0
          %1820 = vmatprep.subr.mxu0 0.0
          %1821 = vmatpush1.msra.mxu0 0.0
          %1822 = vmatprep.subr.mxu0 0.0
          %1823 = vmatpush1.msra.mxu0 0.0
          %1824 = vmatprep.subr.mxu0 0.0
          %1825 = vmatpush1.msra.mxu0 0.0
          %1826 = vmatprep.subr.mxu0 0.0
          %1827 = vmatpush1.msra.mxu0 0.0
          %1828 = vmatprep.subr.mxu0 0.0
          %1829 = vmatpush1.msra.mxu0 0.0
          %1830 = vmatprep.subr.mxu0 0.0
          %1831 = vmatpush1.msra.mxu0 0.0
          %1832 = vmatprep.subr.mxu0 0.0
          %1833 = vmatpush1.msra.mxu0 0.0
          %1834 = vmatprep.subr.mxu0 0.0
          %1835 = vmatpush1.msra.mxu0 0.0
          %1836 = vmatprep.subr.mxu0 0.0
          %1837 = vmatpush1.msra.mxu0 0.0
          %1838 = vmatprep.subr.mxu0 0.0
          %1839 = vmatpush1.msra.mxu0 0.0
          %1840 = vmatprep.subr.mxu0 0.0
          %1841 = vmatpush1.msra.mxu0 0.0
          %1842 = vmatprep.subr.mxu0 0.0
          %1843 = vmatpush1.msra.mxu0 0.0
          %1844 = vmatprep.mubr.f32.mxu0 0.0
          %1845 = vmatmul.mubr.f32.gmra.mrb[0].mxu0 %v1459
          %v1846 = vpop.f32.mrb[0].mxu0
          %v1847 = vadd.f32 %v1617, %v1846
          %v1848 = vpop.f32.mrb[0].mxu0
          %v1849 = vadd.f32 %v1621, %v1848
          %1850 = vdwg.mxu0
          %1851 = vmatprep.subr.mxu0 %v1475
          %1852 = vmatpush1.msra.mxu0 %v1474
          %1853 = vmatprep.subr.mxu0 %v1483
          %1854 = vmatpush1.msra.mxu0 %v1482
          %1855 = vmatprep.subr.mxu0 %v1491
          %1856 = vmatpush1.msra.mxu0 %v1490
          %1857 = vmatprep.subr.mxu0 %v1499
          %1858 = vmatpush1.msra.mxu0 %v1498
          %1859 = vmatprep.subr.mxu0 %v1507
          %1860 = vmatpush1.msra.mxu0 %v1506
          %1861 = vmatprep.subr.mxu0 %v1515
          %1862 = vmatpush1.msra.mxu0 %v1514
          %1863 = vmatprep.subr.mxu0 %v1523
          %1864 = vmatpush1.msra.mxu0 %v1522
          %1865 = vmatprep.subr.mxu0 %v1531
          %1866 = vmatpush1.msra.mxu0 %v1530
          %1867 = vmatprep.subr.mxu0 %v1539
          %1868 = vmatpush1.msra.mxu0 %v1538
          %1869 = vmatprep.subr.mxu0 %v1547
          %1870 = vmatpush1.msra.mxu0 %v1546
          %1871 = vmatprep.subr.mxu0 %v1555
          %1872 = vmatpush1.msra.mxu0 %v1554
          %1873 = vmatprep.subr.mxu0 %v1563
          %1874 = vmatpush1.msra.mxu0 %v1562
          %1875 = vmatprep.subr.mxu0 %v1571
          %1876 = vmatpush1.msra.mxu0 %v1570
          %1877 = vmatprep.subr.mxu0 %v1579
          %1878 = vmatpush1.msra.mxu0 %v1578
          %1879 = vmatprep.subr.mxu0 %v1587
          %1880 = vmatpush1.msra.mxu0 %v1586
          %1881 = vmatprep.subr.mxu0 %v1595
          %1882 = vmatpush1.msra.mxu0 %v1594
          %1883 = vmatprep.subr.mxu0 0.0
          %1884 = vmatpush1.msra.mxu0 0.0
          %1885 = vmatprep.subr.mxu0 0.0
          %1886 = vmatpush1.msra.mxu0 0.0
          %1887 = vmatprep.subr.mxu0 0.0
          %1888 = vmatpush1.msra.mxu0 0.0
          %1889 = vmatprep.subr.mxu0 0.0
          %1890 = vmatpush1.msra.mxu0 0.0
          %1891 = vmatprep.subr.mxu0 0.0
          %1892 = vmatpush1.msra.mxu0 0.0
          %1893 = vmatprep.subr.mxu0 0.0
          %1894 = vmatpush1.msra.mxu0 0.0
          %1895 = vmatprep.subr.mxu0 0.0
          %1896 = vmatpush1.msra.mxu0 0.0
          %1897 = vmatprep.subr.mxu0 0.0
          %1898 = vmatpush1.msra.mxu0 0.0
          %1899 = vmatprep.subr.mxu0 0.0
          %1900 = vmatpush1.msra.mxu0 0.0
          %1901 = vmatprep.subr.mxu0 0.0
          %1902 = vmatpush1.msra.mxu0 0.0
          %1903 = vmatprep.subr.mxu0 0.0
          %1904 = vmatpush1.msra.mxu0 0.0
          %1905 = vmatprep.subr.mxu0 0.0
          %1906 = vmatpush1.msra.mxu0 0.0
          %1907 = vmatprep.subr.mxu0 0.0
          %1908 = vmatpush1.msra.mxu0 0.0
          %1909 = vmatprep.subr.mxu0 0.0
          %1910 = vmatpush1.msra.mxu0 0.0
          %1911 = vmatprep.subr.mxu0 0.0
          %1912 = vmatpush1.msra.mxu0 0.0
          %1913 = vmatprep.subr.mxu0 0.0
          %1914 = vmatpush1.msra.mxu0 0.0
          %1915 = vmatprep.mubr.f32.mxu0 0.0
          %1916 = vmatmul.mubr.f32.gmra.mrb[0].mxu0 %v1459
          %v1917 = vpop.f32.mrb[0].mxu0
          %v1918 = vadd.f32 %v1625, %v1917
          %v1919 = vpop.f32.mrb[0].mxu0
          %v1920 = vadd.f32 %v1629, %v1919
          %1921 = vdwg.mxu0
          %v1922 = vmax.f32 %v1705, 0.0
          %v1923 = vmax.f32 %v1707, 0.0
          %v1924 = vmax.f32 %v1776, 0.0
          %v1925 = vmax.f32 %v1778, 0.0
          %v1926 = vmax.f32 %v1847, 0.0
          %v1927 = vmax.f32 %v1849, 0.0
          %v1928 = vmax.f32 %v1918, 0.0
          %v1929 = vmax.f32 %v1920, 0.0
          %v1930 = vld [vmem:[%s6] sm:$0xff]
          %v1932 = vlaneseq
          %v1933 = vshrl.u32 %v1932, 7
          %v1934 = vsub.s32 0, %v1933
          %v1935 = vrot.slane %v1930, %v1934
          %v1936 = vlaneseq
          %v1937 = vshrl.u32 %v1936, 7
          %v1938 = vsub.s32 1, %v1937
          %v1939 = vrot.slane %v1930, %v1938
          %v1940 = vlaneseq
          %v1941 = vshrl.u32 %v1940, 7
          %v1942 = vsub.s32 2, %v1941
          %v1943 = vrot.slane %v1930, %v1942
          %v1944 = vlaneseq
          %v1945 = vshrl.u32 %v1944, 7
          %v1946 = vsub.s32 3, %v1945
          %v1947 = vrot.slane %v1930, %v1946
          %v1948 = vlaneseq
          %v1949 = vshrl.u32 %v1948, 7
          %v1950 = vsub.s32 4, %v1949
          %v1951 = vrot.slane %v1930, %v1950
          %v1952 = vlaneseq
          %v1953 = vshrl.u32 %v1952, 7
          %v1954 = vsub.s32 5, %v1953
          %v1955 = vrot.slane %v1930, %v1954
          %v1956 = vlaneseq
          %v1957 = vshrl.u32 %v1956, 7
          %v1958 = vsub.s32 6, %v1957
          %v1959 = vrot.slane %v1930, %v1958
          %v1960 = vlaneseq
          %v1961 = vshrl.u32 %v1960, 7
          %v1962 = vsub.s32 7, %v1961
          %v1963 = vrot.slane %v1930, %v1962
          %v1972 = vmul.f32 %v1922, %v1935
          %v1973 = vmul.f32 %v1923, %v1939
          %v1974 = vmul.f32 %v1924, %v1943
          %v1975 = vmul.f32 %v1925, %v1947
          %v1976 = vmul.f32 %v1926, %v1951
          %v1977 = vmul.f32 %v1927, %v1955
          %v1978 = vmul.f32 %v1928, %v1959
          %v1979 = vmul.f32 %v1929, %v1963
          %v1980 = vadd.f32 %v1972, %v1973
          %v1981 = vadd.f32 %v1980, %v1974
          %v1982 = vadd.f32 %v1981, %v1975
          %v1983 = vadd.f32 %v1982, %v1976
          %v1984 = vadd.f32 %v1983, %v1977
          %v1985 = vadd.f32 %v1984, %v1978
          %v1986 = vadd.f32 %v1985, %v1979
          %1987 = vadd.xlane.f32.xlu0 %v1986
          %v1988 = vpop.xlane.xlu0 %1987
          %v1989 = vld [vmem:[#allocation5] sm:$0x1]
          %v1991 = vlaneseq
          %v1992 = vshrl.u32 %v1991, 7
          %v1993 = vsub.s32 0, %v1992
          %v1994 = vrot.slane %v1989, %v1993
          %v1996 = vadd.f32 %v1988, %v1994
          %v1997 = vxor.u32 %v1996, 2147483648
          %v1998 = vmul.f32 %v1997, 1.442695
          %v1999 = vpow.pop %v1998
          %v2000 = vadd.f32 %v1999, 1.0
          %v2001 = vrcp.pop %v2000
          %v2002 = vmul.f32 1.0, %v2001
          %vm2003 = vcmask 7168
          %2004 = vst.msk [vmem:[%s397] sm:$0xff] %vm2003, %v2002
        $region80: #{tpu_custom_call.1} parent=51 // pred_fallthru
          _
        %p2005 = scmp.lt.s32.totalorder %s30, 0
        %s2006 = scalar_select %p2005, %s30, 0
        %s2007 = smul.addr %s2006, 8
        %s2008 = scalar_lea.vmem %s8, %s2007
        // Predicated region
        $region81: #{tpu_custom_call.1} parent=51 // pred_check
          %p2009 = pneg %p231
        $region82: #{tpu_custom_call.1} parent=51 // pred_check_branch
          %2011 = sbr.rel (%p2009) target = $region84
        $region83: #{tpu_custom_call.1} parent=51 // pred_region
          _
        $region84: #{tpu_custom_call.1} parent=51 // pred_fallthru
          _
        // Predicated region
        $region85: #{tpu_custom_call.1} parent=51 // pred_check
          %p2012 = pneg %p231
        $region86: #{tpu_custom_call.1} parent=51 // pred_check_branch
          %2014 = sbr.rel (%p2012) target = $region88
        $region87: #{tpu_custom_call.1} parent=51 // pred_region
          %p2015 = scmp.lt.s32.totalorder %s30, 0
          %s2016 = scalar_select %p2015, %s30, 0
          %s2017 = smul.addr %s2016, 8
          %s2018 = scalar_lea.vmem %s8, %s2017
        $region88: #{tpu_custom_call.1} parent=51 // pred_fallthru
          _
      $region52: #{tpu_custom_call.1} parent=5 // pred_fallthru
        _
      %p2019 = scmp.le.s32.totalorder 2, %s21
      // Predicated region
      $region89: #{tpu_custom_call.1} parent=5 // pred_check
        %p2020 = pneg %p2019
      $region90: #{tpu_custom_call.1} parent=5 // pred_check_branch
        %2022 = sbr.rel (%p2020) target = $region92
      $region91: #{tpu_custom_call.1} parent=5 // pred_region
        %s2023 = ssub.s32 %s21, 2
      $region92: #{tpu_custom_call.1} parent=5 // pred_fallthru
        _
    $region6: #{tpu_custom_call.1} parent=1 // loop_footer
      %s25 = sadd.s32 1, %s21
    $region7: #{tpu_custom_call.1} parent=1 // loop_footer_branch
      %20 = sbr.rel target = $region3
    $region8: #{tpu_custom_call.1} parent=1 // loop_exit
      _
    %2024 = vsyncpa [#allocation7], 1
    %s2025 = scalar_lea.sflag [#allocation7], 1
    %2026 = vsyncpa %s2025, 1
    %2027 = vsyncpa [#allocation9], 1
    %2028 = vsyncpa [#allocation12], 1

</llo_original>
